<compile_context>
chip_gen: v7x
topology: tpu7x:2x2x1
jax: 0.10.0
libtpu: 0.0.40
codegen_flags: <defaults>
</compile_context>

<pallas_src>
import functools

import jax
import jax.numpy as jnp
from jax.experimental import pallas as pl
from jax.experimental.pallas import tpu as pltpu

LANES = 128
_NEG_BIG = -1e30  # mask value for padded class lanes (exp() underflows to 0)


def fastgcn_kernel(support1_ref, adj1_ref, adj2_ref, b1_ref, w2_ref, b2_ref,
                   out_ref, *, n_class):
    # Layer 1 (whole row block): h = relu(adj1 @ support1 + b1)   [M, H] f32
    h = jnp.dot(adj1_ref[...], support1_ref[...],
                preferred_element_type=jnp.float32) + b1_ref[...]
    h = jnp.maximum(h, 0.0)
    # TODO(synk): dropout is identity here (eval mode); a training-mode kernel
    # would use pltpu.prng_seed + pltpu.stateful_bernoulli on h.

    # Layer-2 aggregation for this k-tile: agg = adj2[k] @ h   [tk, H] f32 acc
    agg = jnp.dot(adj2_ref[...], h.astype(jnp.bfloat16),
                  preferred_element_type=jnp.float32)

    # Projection stays f32 end-to-end: z = agg @ W2 + b2   [tk, Cp]
    z = jnp.dot(agg, w2_ref[...], preferred_element_type=jnp.float32) + b2_ref[...]

    # Mask padded class lanes so they don't perturb the softmax.
    lane = jax.lax.broadcasted_iota(jnp.int32, z.shape, 1)
    z = jnp.where(lane < n_class, z, _NEG_BIG)

    # Row-wise log-softmax (f32, max-shifted for stability).
    z_max = jnp.max(z, axis=1, keepdims=True)
    shifted = z - z_max
    lse = jnp.log(jnp.sum(jnp.exp(shifted), axis=1, keepdims=True))
    out_ref[...] = (shifted - lse).astype(out_ref.dtype)


def _default_num_k_tiles(K):
    """2 k-tiles on dual-TensorCore v7x, otherwise a single grid step."""
    try:
        kind = jax.devices()[0].device_kind.lower()
    except Exception:  # pragma: no cover - conservative fallback
        kind = ""
    if "v7" in kind and K % 2 == 0 and (K // 2) % 8 == 0:
        return 2
    return 1


def fastgcn_forward(feature, adj1, adj2, w1, b1, w2, b2, *, num_k_tiles=None):
    N, F = feature.shape
    M = adj1.shape[0]
    K = adj2.shape[0]
    H = w1.shape[1]
    C = w2.shape[1]
    assert adj1.shape == (M, N) and adj2.shape == (K, M)

    kt = _default_num_k_tiles(K) if num_k_tiles is None else num_k_tiles
    assert K % kt == 0, "K must divide evenly into k tiles"
    tk = K // kt
    assert tk % 8 == 0, "k tile rows must be sublane-aligned"

    Cp = pl.cdiv(C, LANES) * LANES          # lane-dense output width (>=128)

    # support1 = feature @ W1 computed once, in f32, on the wrapper side; the
    # kernel only sees the bf16 result (MXU operand) as a resident input.
    support1_bf = (feature.astype(jnp.float32) @ w1.astype(jnp.float32)
                   ).astype(jnp.bfloat16)

    adj1_bf = adj1.astype(jnp.bfloat16)
    adj2_bf = adj2.astype(jnp.bfloat16)
    b1_f = b1.reshape(1, H).astype(jnp.float32)
    # W2 / b2 zero-padded to 128 lanes; W2 kept f32 for the final projection.
    w2_p = jnp.zeros((H, Cp), jnp.float32).at[:, :C].set(w2.astype(jnp.float32))
    b2_p = jnp.zeros((1, Cp), jnp.float32).at[:, :C].set(
        b2.reshape(1, C).astype(jnp.float32))

    grid = (kt,)

    # Advisory cost estimate for XLA's scheduler (adj1 counted once).
    flops = 2 * (kt * M * N * H + K * M * H + K * H * Cp)
    cost = pl.CostEstimate(
        flops=flops,
        transcendentals=K * Cp + K,                      # exp + log
        bytes_accessed=(support1_bf.size + adj1_bf.size + adj2_bf.size) * 2
                       + (b1_f.size + w2_p.size + b2_p.size + K * Cp) * 4)

    grid_spec = pltpu.PrefetchScalarGridSpec(
        num_scalar_prefetch=0,
        grid=grid,
        in_specs=[
            pl.BlockSpec((N, H), lambda k: (0, 0)),      # support1 (resident)
            pl.BlockSpec((M, N), lambda k: (0, 0)),      # adj1 (resident, 1 DMA)
            pl.BlockSpec((tk, M), lambda k: (k, 0)),     # adj2 row tile
            pl.BlockSpec((1, H), lambda k: (0, 0)),      # b1 (resident)
            pl.BlockSpec((H, Cp), lambda k: (0, 0)),     # W2 (f32, padded)
            pl.BlockSpec((1, Cp), lambda k: (0, 0)),     # b2 (f32, padded)
        ],
        out_specs=pl.BlockSpec((tk, Cp), lambda k: (k, 0)),
    )

    out_padded = pl.pallas_call(
        functools.partial(fastgcn_kernel, n_class=C),
        out_shape=jax.ShapeDtypeStruct((K, Cp), jnp.float32),
        grid_spec=grid_spec,
        compiler_params=pltpu.CompilerParams(
            dimension_semantics=("parallel",),
            vmem_limit_bytes=32 * 1024 * 1024),
        cost_estimate=cost,
    )(support1_bf, adj1_bf, adj2_bf, b1_f, w2_p, b2_p)

    return out_padded[:, :C]


def _reference(feature, adj1, adj2, w1, b1, w2, b2):
    h = jnp.maximum(adj1 @ (feature @ w1) + b1, 0.0)
    z = adj2 @ (h @ w2) + b2
    return jax.nn.log_softmax(z, axis=1)


if __name__ == "__main__":
    # Small but tile-aligned shapes consistent with FastGCN:
    #   sampled nodes N = M = K = 256, n_feature=128, n_hidden=64, n_class=8
    N, M, K = 256, 256, 256
    n_feature, n_hidden, n_class = 128, 64, 8

    key = jax.random.PRNGKey(0)
    k_feat, k_a1, k_a2, k_w1, k_b1, k_w2, k_b2 = jax.random.split(key, 7)

    feature = jax.random.normal(k_feat, (N, n_feature), dtype=jnp.float32)
    adj1 = jax.random.uniform(k_a1, (M, N), dtype=jnp.float32) / N
    adj2 = jax.random.uniform(k_a2, (K, M), dtype=jnp.float32) / M

    # Deterministic parameter init (uniform, as in GraphConvolution.reset_parameters)
    bound1 = 1.0 / (n_hidden ** 0.5)
    bound2 = 1.0 / (n_class ** 0.5)
    w1 = jax.random.uniform(k_w1, (n_feature, n_hidden), jnp.float32, -bound1, bound1)
    b1 = jax.random.uniform(k_b1, (1, n_hidden), jnp.float32, -bound1, bound1)
    w2 = jax.random.uniform(k_w2, (n_hidden, n_class), jnp.float32, -bound2, bound2)
    b2 = jax.random.uniform(k_b2, (1, n_class), jnp.float32, -bound2, bound2)

    out = fastgcn_forward(feature, adj1, adj2, w1, b1, w2, b2)
    out = jax.block_until_ready(out)

    ref = _reference(feature, adj1, adj2, w1, b1, w2, b2)
    assert out.shape == (K, n_class)
    # bf16 MXU operands with f32 accumulation -> relaxed tolerance vs f32 ref.
    max_err = float(jnp.max(jnp.abs(out - ref)))
    assert jnp.allclose(out, ref, atol=2e-2, rtol=2e-2), max_err

    print("KERNEL_OK")
</pallas_src>

<mosaic_0001>
module attributes {stable_mosaic.version = 11 : i64} {
  func.func @fastgcn_kernel(%arg0: i32, %arg1: memref<256x64xbf16, #tpu.memory_space<vmem>>, %arg2: memref<256x256xbf16, #tpu.memory_space<vmem>>, %arg3: memref<256x256xbf16, #tpu.memory_space<vmem>>, %arg4: memref<1x64xf32, #tpu.memory_space<vmem>>, %arg5: memref<64x128xf32, #tpu.memory_space<vmem>>, %arg6: memref<1x128xf32, #tpu.memory_space<vmem>>, %arg7: memref<256x128xf32, #tpu.memory_space<vmem>>) attributes {dimension_semantics = [#tpu.dimension_semantics<parallel>], iteration_bounds = array<i64: 1>, scalar_prefetch = 0 : i64, scratch_operands = 0 : i64, tpu.core_type = #tpu.core_type<tc>, window_params = [{pipeline_mode = #tpu.pipeline_mode<synchronous>, transform_indices = @transform_0, window_bounds = array<i64: 256, 64>}, {pipeline_mode = #tpu.pipeline_mode<synchronous>, transform_indices = @transform_1, window_bounds = array<i64: 256, 256>}, {transform_indices = @transform_2, window_bounds = array<i64: 256, 256>}, {pipeline_mode = #tpu.pipeline_mode<synchronous>, transform_indices = @transform_3, window_bounds = array<i64: 1, 64>}, {pipeline_mode = #tpu.pipeline_mode<synchronous>, transform_indices = @transform_4, window_bounds = array<i64: 64, 128>}, {pipeline_mode = #tpu.pipeline_mode<synchronous>, transform_indices = @transform_5, window_bounds = array<i64: 1, 128>}, {transform_indices = @transform_6, window_bounds = array<i64: 256, 128>}]} {
    %c0 = arith.constant 0 : index
    %c0_0 = arith.constant 0 : index
    %0 = vector.load %arg2[%c0, %c0_0] : memref<256x256xbf16, #tpu.memory_space<vmem>>, vector<256x256xbf16>
    %c0_1 = arith.constant 0 : index
    %c0_2 = arith.constant 0 : index
    %1 = vector.load %arg1[%c0_1, %c0_2] : memref<256x64xbf16, #tpu.memory_space<vmem>>, vector<256x64xbf16>
    %cst = arith.constant dense<0.000000e+00> : vector<256x64xf32>
    %2 = tpu.matmul %0, %1, %cst {dimension_numbers = #tpu.dot_dimension_numbers<[1], [0], [0], [1], [0, 0, 1, 1], [], []>} : vector<256x256xbf16>, vector<256x64xbf16>, vector<256x64xf32> -> vector<256x64xf32>
    %c0_3 = arith.constant 0 : index
    %c0_4 = arith.constant 0 : index
    %3 = vector.load %arg4[%c0_3, %c0_4] : memref<1x64xf32, #tpu.memory_space<vmem>>, vector<1x64xf32>
    %4 = vector.broadcast %3 : vector<1x64xf32> to vector<256x64xf32>
    %5 = arith.addf %2, %4 : vector<256x64xf32>
    %cst_5 = arith.constant 0.000000e+00 : f32
    %6 = vector.broadcast %cst_5 : f32 to vector<256x64xf32>
    %7 = arith.maximumf %5, %6 : vector<256x64xf32>
    %c0_6 = arith.constant 0 : index
    %c0_7 = arith.constant 0 : index
    %8 = vector.load %arg3[%c0_6, %c0_7] : memref<256x256xbf16, #tpu.memory_space<vmem>>, vector<256x256xbf16>
    %9 = arith.truncf %7 : vector<256x64xf32> to vector<256x64xbf16>
    %cst_8 = arith.constant dense<0.000000e+00> : vector<256x64xf32>
    %10 = tpu.matmul %8, %9, %cst_8 {dimension_numbers = #tpu.dot_dimension_numbers<[1], [0], [0], [1], [0, 0, 1, 1], [], []>} : vector<256x256xbf16>, vector<256x64xbf16>, vector<256x64xf32> -> vector<256x64xf32>
    %c0_9 = arith.constant 0 : index
    %c0_10 = arith.constant 0 : index
    %11 = vector.load %arg5[%c0_9, %c0_10] : memref<64x128xf32, #tpu.memory_space<vmem>>, vector<64x128xf32>
    %cst_11 = arith.constant dense<0.000000e+00> : vector<256x128xf32>
    %12 = tpu.matmul %10, %11, %cst_11 {dimension_numbers = #tpu.dot_dimension_numbers<[1], [0], [0], [1], [0, 0, 1, 1], [], []>} : vector<256x64xf32>, vector<64x128xf32>, vector<256x128xf32> -> vector<256x128xf32>
    %c0_12 = arith.constant 0 : index
    %c0_13 = arith.constant 0 : index
    %13 = vector.load %arg6[%c0_12, %c0_13] : memref<1x128xf32, #tpu.memory_space<vmem>>, vector<1x128xf32>
    %14 = vector.broadcast %13 : vector<1x128xf32> to vector<256x128xf32>
    %15 = arith.addf %12, %14 : vector<256x128xf32>
    %16 = tpu.iota {dimensions = array<i32: 1>} : vector<256x128xi32>
    %c8_i32 = arith.constant 8 : i32
    %17 = vector.broadcast %c8_i32 : i32 to vector<256x128xi32>
    %18 = arith.cmpi slt, %16, %17 : vector<256x128xi32>
    %cst_14 = arith.constant -1.000000e+30 : f32
    %19 = vector.broadcast %cst_14 : f32 to vector<256x128xf32>
    %20 = arith.select %18, %15, %19 : vector<256x128xi1>, vector<256x128xf32>
    %cst_15 = arith.constant dense<0xFF800000> : vector<256xf32>
    %21 = vector.multi_reduction <maximumf>, %20, %cst_15 [1] : vector<256x128xf32> to vector<256xf32>
    %22 = vector.shape_cast %21 : vector<256xf32> to vector<256x1xf32>
    %23 = vector.broadcast %22 : vector<256x1xf32> to vector<256x128xf32>
    %24 = arith.subf %20, %23 : vector<256x128xf32>
    %25 = math.exp %24 : vector<256x128xf32>
    %cst_16 = arith.constant dense<0.000000e+00> : vector<256xf32>
    %26 = vector.multi_reduction <add>, %25, %cst_16 [1] : vector<256x128xf32> to vector<256xf32>
    %27 = vector.shape_cast %26 : vector<256xf32> to vector<256x1xf32>
    %28 = math.log %27 : vector<256x1xf32>
    %29 = vector.broadcast %28 : vector<256x1xf32> to vector<256x128xf32>
    %30 = arith.subf %24, %29 : vector<256x128xf32>
    %c0_17 = arith.constant 0 : index
    %c0_18 = arith.constant 0 : index
    %31 = vector.load %arg7[%c0_17, %c0_18] : memref<256x128xf32, #tpu.memory_space<vmem>>, vector<256x128xf32>
    tpu.vector_store %arg7[%c0_17, %c0_18], %30 {strides = array<i32>} : memref<256x128xf32, #tpu.memory_space<vmem>>, vector<256x128xf32>,
    return
  }
  func.func @transform_0(%arg0: i32) -> (i32, i32) {
    %c0_i32 = arith.constant 0 : i32
    %c0_i32_0 = arith.constant 0 : i32
    %c0_i32_1 = arith.constant 0 : i32
    return %c0_i32, %c0_i32_0 : i32, i32
  }
  func.func @transform_1(%arg0: i32) -> (i32, i32) {
    %c0_i32 = arith.constant 0 : i32
    %c0_i32_0 = arith.constant 0 : i32
    %c0_i32_1 = arith.constant 0 : i32
    return %c0_i32, %c0_i32_0 : i32, i32
  }
  func.func @transform_2(%arg0: i32) -> (i32, i32) {
    %c0_i32 = arith.constant 0 : i32
    %c0_i32_0 = arith.constant 0 : i32
    return %arg0, %c0_i32 : i32, i32
  }
  func.func @transform_3(%arg0: i32) -> (i32, i32) {
    %c0_i32 = arith.constant 0 : i32
    %c0_i32_0 = arith.constant 0 : i32
    %c0_i32_1 = arith.constant 0 : i32
    return %c0_i32, %c0_i32_0 : i32, i32
  }
  func.func @transform_4(%arg0: i32) -> (i32, i32) {
    %c0_i32 = arith.constant 0 : i32
    %c0_i32_0 = arith.constant 0 : i32
    %c0_i32_1 = arith.constant 0 : i32
    return %c0_i32, %c0_i32_0 : i32, i32
  }
  func.func @transform_5(%arg0: i32) -> (i32, i32) {
    %c0_i32 = arith.constant 0 : i32
    %c0_i32_0 = arith.constant 0 : i32
    %c0_i32_1 = arith.constant 0 : i32
    return %c0_i32, %c0_i32_0 : i32, i32
  }
  func.func @transform_6(%arg0: i32) -> (i32, i32) {
    %c0_i32 = arith.constant 0 : i32
    %c0_i32_0 = arith.constant 0 : i32
    return %arg0, %c0_i32 : i32, i32
  }
}

</mosaic_0001>

<llo_original>
// kernel: tpu_custom_call.1
$region0: #{tpu_custom_call.1}
  #allocation0 [shape = 'u32[]', space=smem, size = 0x4, offset = 0x4, fixed_abs, tag = 'smem constant byte address 0x4 - core index']
  #allocation1 [shape = 'u32[144,128]{1,0:T(1,128)}', space=vmem, size = 0x12000, scoped, tag = 'internal scratch']
  %s0 = inlined_call_operand.vmem [shape: bf16[256,64], index: 0, kind: input, shape index: {}]
  %s1 = inlined_call_operand.hbm [shape: bf16[256,256], index: 1, kind: input, shape index: {}]
  %s2 = inlined_call_operand.hbm [shape: bf16[256,256], index: 2, kind: input, shape index: {}]
  %s3 = inlined_call_operand.vmem [shape: f32[1,64], index: 3, kind: input, shape index: {}]
  %s4 = inlined_call_operand.vmem [shape: f32[64,128], index: 4, kind: input, shape index: {}]
  %s5 = inlined_call_operand.vmem [shape: f32[1,128], index: 5, kind: input, shape index: {}]
  %s6 = inlined_call_operand.hbm [shape: f32[256,128], index: 6, kind: output, shape index: {}]
  %s7 = sld [smem:[#allocation0]]
  $region42: #{tpu_custom_call.1} parent=0
    _
  %s9 = ssub.s32 1, %s7
  %s10 = scalar_select 0, %s9, %s7
  $region1: #{tpu_custom_call.1} parent=0
    #allocation2 [shape = 'u8[131072]{0}', space=vmem, size = 0x20000, scoped, tag = 'input window, operand 1, single buffered']
    #allocation3 [shape = 's32[1]{0}', space=sflag, size = 0x4, scoped, tag = 'scoped memory for tpu_custom_call.1']
    #allocation4 [shape = 's32[1]{0}', space=sflag, size = 0x4, scoped, tag = 'scoped memory for tpu_custom_call.1']
    #allocation5 [shape = 'u8[131072]{0}', space=vmem, size = 0x20000, scoped, tag = 'input window, operand 2, single buffered']
    #allocation6 [shape = 's32[1]{0}', space=sflag, size = 0x4, scoped, tag = 'scoped memory for tpu_custom_call.1']
    #allocation7 [shape = 'u8[131072]{0}', space=vmem, size = 0x20000, scoped, tag = 'output window, operand 0, single buffered']
    %11 = vsyncpa [#allocation3], 0
    %12 = vsyncpa [#allocation6], 0
    %13 = vsyncpa [#allocation4], 0
    // Predicated region
    $region2: #{tpu_custom_call.1} parent=1 // pred_check
      _
    $region3: #{tpu_custom_call.1} parent=1 // pred_check_branch
      %15 = sbr.rel (0) target = $region5
    $region4: #{tpu_custom_call.1} parent=1 // pred_region
      _
    $region5: #{tpu_custom_call.1} parent=1 // pred_fallthru
      _
    // Predicated region
    $region6: #{tpu_custom_call.1} parent=1 // pred_check
      _
    $region7: #{tpu_custom_call.1} parent=1 // pred_check_branch
      %17 = sbr.rel (0) target = $region9
    $region8: #{tpu_custom_call.1} parent=1 // pred_region
      %s19 = ssub.s32 4096, 4096
      %20 = vsyncadd [#allocation3], %s19
      %s21 = sshll.u32 [#allocation2], 4
      %s22 = int_to_ptr.vmem [resolvable:$true] %s21
      %27 = dma.hbm_to_vmem [thread:$0]  %s1, 4096, %s22, [#allocation3], 128, 128, 8
    $region9: #{tpu_custom_call.1} parent=1 // pred_fallthru
      _
    // Predicated region
    $region10: #{tpu_custom_call.1} parent=1 // pred_check
      _
    $region11: #{tpu_custom_call.1} parent=1 // pred_check_branch
      %29 = sbr.rel (0) target = $region13
    $region12: #{tpu_custom_call.1} parent=1 // pred_region
      %s31 = ssub.s32 4096, 4096
      %32 = vsyncadd [#allocation6], %s31
      %s33 = sshll.u32 [#allocation5], 4
      %s34 = int_to_ptr.vmem [resolvable:$true] %s33
      %39 = dma.hbm_to_vmem [thread:$0]  %s2, 4096, %s34, [#allocation6], 128, 128, 8
    $region13: #{tpu_custom_call.1} parent=1 // pred_fallthru
      _
    // Predicated region
    $region14: #{tpu_custom_call.1} parent=1 // pred_check
      _
    $region15: #{tpu_custom_call.1} parent=1 // pred_check_branch
      %41 = sbr.rel (0) target = $region17
    $region16: #{tpu_custom_call.1} parent=1 // pred_region
      _
    $region17: #{tpu_custom_call.1} parent=1 // pred_fallthru
      _
    // Predicated region
    $region18: #{tpu_custom_call.1} parent=1 // pred_check
      _
    $region19: #{tpu_custom_call.1} parent=1 // pred_check_branch
      %43 = sbr.rel (0) target = $region21
    $region20: #{tpu_custom_call.1} parent=1 // pred_region
      _
    $region21: #{tpu_custom_call.1} parent=1 // pred_fallthru
      _
    // Predicated region
    $region22: #{tpu_custom_call.1} parent=1 // pred_check
      _
    $region23: #{tpu_custom_call.1} parent=1 // pred_check_branch
      %45 = sbr.rel (0) target = $region25
    $region24: #{tpu_custom_call.1} parent=1 // pred_region
      _
    $region25: #{tpu_custom_call.1} parent=1 // pred_fallthru
      _
    // Predicated region
    $region26: #{tpu_custom_call.1} parent=1 // pred_check
      _
    $region27: #{tpu_custom_call.1} parent=1 // pred_check_branch
      %47 = sbr.rel (0) target = $region29
    $region28: #{tpu_custom_call.1} parent=1 // pred_region
      %48 = dma.done [#allocation3], 4096
    $region29: #{tpu_custom_call.1} parent=1 // pred_fallthru
      _
    // Predicated region
    $region30: #{tpu_custom_call.1} parent=1 // pred_check
      _
    $region31: #{tpu_custom_call.1} parent=1 // pred_check_branch
      %50 = sbr.rel (0) target = $region33
    $region32: #{tpu_custom_call.1} parent=1 // pred_region
      %51 = dma.done [#allocation6], 4096
    $region33: #{tpu_custom_call.1} parent=1 // pred_fallthru
      _
    %v53 = vld [vmem:[#allocation2] sm:$0xff]
    %v54 = vld [vmem:[#allocation2 + $0x8] sm:$0xff]
    %v55 = vld [vmem:[#allocation2 + $0x10] sm:$0xff]
    %v56 = vld [vmem:[#allocation2 + $0x18] sm:$0xff]
    %v57 = vld [vmem:[#allocation2 + $0x20] sm:$0xff]
    %v58 = vld [vmem:[#allocation2 + $0x28] sm:$0xff]
    %v59 = vld [vmem:[#allocation2 + $0x30] sm:$0xff]
    %v60 = vld [vmem:[#allocation2 + $0x38] sm:$0xff]
    %v61 = vld [vmem:[#allocation2 + $0x40] sm:$0xff]
    %v62 = vld [vmem:[#allocation2 + $0x48] sm:$0xff]
    %v63 = vld [vmem:[#allocation2 + $0x50] sm:$0xff]
    %v64 = vld [vmem:[#allocation2 + $0x58] sm:$0xff]
    %v65 = vld [vmem:[#allocation2 + $0x60] sm:$0xff]
    %v66 = vld [vmem:[#allocation2 + $0x68] sm:$0xff]
    %v67 = vld [vmem:[#allocation2 + $0x70] sm:$0xff]
    %v68 = vld [vmem:[#allocation2 + $0x78] sm:$0xff]
    %v69 = vld [vmem:[#allocation2 + $0x80] sm:$0xff]
    %v70 = vld [vmem:[#allocation2 + $0x88] sm:$0xff]
    %v71 = vld [vmem:[#allocation2 + $0x90] sm:$0xff]
    %v72 = vld [vmem:[#allocation2 + $0x98] sm:$0xff]
    %v73 = vld [vmem:[#allocation2 + $0xa0] sm:$0xff]
    %v74 = vld [vmem:[#allocation2 + $0xa8] sm:$0xff]
    %v75 = vld [vmem:[#allocation2 + $0xb0] sm:$0xff]
    %v76 = vld [vmem:[#allocation2 + $0xb8] sm:$0xff]
    %v77 = vld [vmem:[#allocation2 + $0xc0] sm:$0xff]
    %v78 = vld [vmem:[#allocation2 + $0xc8] sm:$0xff]
    %v79 = vld [vmem:[#allocation2 + $0xd0] sm:$0xff]
    %v80 = vld [vmem:[#allocation2 + $0xd8] sm:$0xff]
    %v81 = vld [vmem:[#allocation2 + $0xe0] sm:$0xff]
    %v82 = vld [vmem:[#allocation2 + $0xe8] sm:$0xff]
    %v83 = vld [vmem:[#allocation2 + $0xf0] sm:$0xff]
    %v84 = vld [vmem:[#allocation2 + $0xf8] sm:$0xff]
    %v85 = vld [vmem:[%s0] sm:$0xf]
    %v86 = vld [vmem:[%s0 + $0x4] sm:$0xf]
    %v87 = vld [vmem:[%s0 + $0x8] sm:$0xf]
    %v88 = vld [vmem:[%s0 + $0xc] sm:$0xf]
    %v89 = vld [vmem:[%s0 + $0x10] sm:$0xf]
    %v90 = vld [vmem:[%s0 + $0x14] sm:$0xf]
    %v91 = vld [vmem:[%s0 + $0x18] sm:$0xf]
    %v92 = vld [vmem:[%s0 + $0x1c] sm:$0xf]
    %v93 = vld [vmem:[%s0 + $0x20] sm:$0xf]
    %v94 = vld [vmem:[%s0 + $0x24] sm:$0xf]
    %v95 = vld [vmem:[%s0 + $0x28] sm:$0xf]
    %v96 = vld [vmem:[%s0 + $0x2c] sm:$0xf]
    %v97 = vld [vmem:[%s0 + $0x30] sm:$0xf]
    %v98 = vld [vmem:[%s0 + $0x34] sm:$0xf]
    %v99 = vld [vmem:[%s0 + $0x38] sm:$0xf]
    %v100 = vld [vmem:[%s0 + $0x3c] sm:$0xf]
    %v101 = vld [vmem:[%s0 + $0x40] sm:$0xf]
    %v102 = vld [vmem:[%s0 + $0x44] sm:$0xf]
    %v103 = vld [vmem:[%s0 + $0x48] sm:$0xf]
    %v104 = vld [vmem:[%s0 + $0x4c] sm:$0xf]
    %v105 = vld [vmem:[%s0 + $0x50] sm:$0xf]
    %v106 = vld [vmem:[%s0 + $0x54] sm:$0xf]
    %v107 = vld [vmem:[%s0 + $0x58] sm:$0xf]
    %v108 = vld [vmem:[%s0 + $0x5c] sm:$0xf]
    %v109 = vld [vmem:[%s0 + $0x60] sm:$0xf]
    %v110 = vld [vmem:[%s0 + $0x64] sm:$0xf]
    %v111 = vld [vmem:[%s0 + $0x68] sm:$0xf]
    %v112 = vld [vmem:[%s0 + $0x6c] sm:$0xf]
    %v113 = vld [vmem:[%s0 + $0x70] sm:$0xf]
    %v114 = vld [vmem:[%s0 + $0x74] sm:$0xf]
    %v115 = vld [vmem:[%s0 + $0x78] sm:$0xf]
    %v116 = vld [vmem:[%s0 + $0x7c] sm:$0xf]
    %v117 = vld [vmem:[%s3] sm:$0x1]
    %v119 = vlaneseq
    %v120 = vshrl.u32 %v119, 7
    %v121 = vsub.s32 0, %v120
    %v122 = vrot.slane %v117, %v121
    %v156 = vunpack.c.l.b16 %v53
    %v157 = vunpack.c.h.b16 %v53
    %v158 = vunpack.c.l.b16 %v54
    %v159 = vunpack.c.h.b16 %v54
    %v160 = vunpack.c.l.b16 %v55
    %v161 = vunpack.c.h.b16 %v55
    %v162 = vunpack.c.l.b16 %v56
    %v163 = vunpack.c.h.b16 %v56
    %v164 = vunpack.c.l.b16 %v57
    %v165 = vunpack.c.h.b16 %v57
    %v166 = vunpack.c.l.b16 %v58
    %v167 = vunpack.c.h.b16 %v58
    %v168 = vunpack.c.l.b16 %v59
    %v169 = vunpack.c.h.b16 %v59
    %v170 = vunpack.c.l.b16 %v60
    %v171 = vunpack.c.h.b16 %v60
    %v172 = vunpack.c.l.b16 %v61
    %v173 = vunpack.c.h.b16 %v61
    %v174 = vunpack.c.l.b16 %v62
    %v175 = vunpack.c.h.b16 %v62
    %v176 = vunpack.c.l.b16 %v63
    %v177 = vunpack.c.h.b16 %v63
    %v178 = vunpack.c.l.b16 %v64
    %v179 = vunpack.c.h.b16 %v64
    %v180 = vunpack.c.l.b16 %v65
    %v181 = vunpack.c.h.b16 %v65
    %v182 = vunpack.c.l.b16 %v66
    %v183 = vunpack.c.h.b16 %v66
    %v184 = vunpack.c.l.b16 %v67
    %v185 = vunpack.c.h.b16 %v67
    %v186 = vunpack.c.l.b16 %v68
    %v187 = vunpack.c.h.b16 %v68
    %v188 = vunpack.c.l.b16 %v69
    %v189 = vunpack.c.h.b16 %v69
    %v190 = vunpack.c.l.b16 %v70
    %v191 = vunpack.c.h.b16 %v70
    %v192 = vunpack.c.l.b16 %v71
    %v193 = vunpack.c.h.b16 %v71
    %v194 = vunpack.c.l.b16 %v72
    %v195 = vunpack.c.h.b16 %v72
    %v196 = vunpack.c.l.b16 %v73
    %v197 = vunpack.c.h.b16 %v73
    %v198 = vunpack.c.l.b16 %v74
    %v199 = vunpack.c.h.b16 %v74
    %v200 = vunpack.c.l.b16 %v75
    %v201 = vunpack.c.h.b16 %v75
    %v202 = vunpack.c.l.b16 %v76
    %v203 = vunpack.c.h.b16 %v76
    %v204 = vunpack.c.l.b16 %v77
    %v205 = vunpack.c.h.b16 %v77
    %v206 = vunpack.c.l.b16 %v78
    %v207 = vunpack.c.h.b16 %v78
    %v208 = vunpack.c.l.b16 %v79
    %v209 = vunpack.c.h.b16 %v79
    %v210 = vunpack.c.l.b16 %v80
    %v211 = vunpack.c.h.b16 %v80
    %v212 = vunpack.c.l.b16 %v81
    %v213 = vunpack.c.h.b16 %v81
    %v214 = vunpack.c.l.b16 %v82
    %v215 = vunpack.c.h.b16 %v82
    %v216 = vunpack.c.l.b16 %v83
    %v217 = vunpack.c.h.b16 %v83
    %v218 = vunpack.c.l.b16 %v84
    %v219 = vunpack.c.h.b16 %v84
    %v220 = vpack.c.b16 %v158, %v156
    %v221 = vpack.c.b16 %v159, %v157
    %v222 = vpack.c.b16 %v162, %v160
    %v223 = vpack.c.b16 %v163, %v161
    %v224 = vpack.c.b16 %v166, %v164
    %v225 = vpack.c.b16 %v167, %v165
    %v226 = vpack.c.b16 %v170, %v168
    %v227 = vpack.c.b16 %v171, %v169
    %v228 = vpack.c.b16 %v174, %v172
    %v229 = vpack.c.b16 %v175, %v173
    %v230 = vpack.c.b16 %v178, %v176
    %v231 = vpack.c.b16 %v179, %v177
    %v232 = vpack.c.b16 %v182, %v180
    %v233 = vpack.c.b16 %v183, %v181
    %v234 = vpack.c.b16 %v186, %v184
    %v235 = vpack.c.b16 %v187, %v185
    %v236 = vpack.c.b16 %v190, %v188
    %v237 = vpack.c.b16 %v191, %v189
    %v238 = vpack.c.b16 %v194, %v192
    %v239 = vpack.c.b16 %v195, %v193
    %v240 = vpack.c.b16 %v198, %v196
    %v241 = vpack.c.b16 %v199, %v197
    %v242 = vpack.c.b16 %v202, %v200
    %v243 = vpack.c.b16 %v203, %v201
    %v244 = vpack.c.b16 %v206, %v204
    %v245 = vpack.c.b16 %v207, %v205
    %v246 = vpack.c.b16 %v210, %v208
    %v247 = vpack.c.b16 %v211, %v209
    %v248 = vpack.c.b16 %v214, %v212
    %v249 = vpack.c.b16 %v215, %v213
    %v250 = vpack.c.b16 %v218, %v216
    %v251 = vpack.c.b16 %v219, %v217
    %v316 = vunpack.c.l.b16 %v85
    %v317 = vunpack.c.l.b16 %v86
    %v318 = vunpack.c.l.b16 %v87
    %v319 = vunpack.c.l.b16 %v88
    %v320 = vunpack.c.l.b16 %v89
    %v321 = vunpack.c.l.b16 %v90
    %v322 = vunpack.c.l.b16 %v91
    %v323 = vunpack.c.l.b16 %v92
    %v324 = vunpack.c.l.b16 %v93
    %v325 = vunpack.c.l.b16 %v94
    %v326 = vunpack.c.l.b16 %v95
    %v327 = vunpack.c.l.b16 %v96
    %v328 = vunpack.c.l.b16 %v97
    %v329 = vunpack.c.l.b16 %v98
    %v330 = vunpack.c.l.b16 %v99
    %v331 = vunpack.c.l.b16 %v100
    %v332 = vunpack.c.l.b16 %v101
    %v333 = vunpack.c.l.b16 %v102
    %v334 = vunpack.c.l.b16 %v103
    %v335 = vunpack.c.l.b16 %v104
    %v336 = vunpack.c.l.b16 %v105
    %v337 = vunpack.c.l.b16 %v106
    %v338 = vunpack.c.l.b16 %v107
    %v339 = vunpack.c.l.b16 %v108
    %v340 = vunpack.c.l.b16 %v109
    %v341 = vunpack.c.l.b16 %v110
    %v342 = vunpack.c.l.b16 %v111
    %v343 = vunpack.c.l.b16 %v112
    %v344 = vunpack.c.l.b16 %v113
    %v345 = vunpack.c.l.b16 %v114
    %v346 = vunpack.c.l.b16 %v115
    %v347 = vunpack.c.l.b16 %v116
    %v348 = vpack.c.b16 %v317, %v316
    %v349 = vpack.c.b16 %v319, %v318
    %v350 = vpack.c.b16 %v321, %v320
    %v351 = vpack.c.b16 %v323, %v322
    %v352 = vpack.c.b16 %v325, %v324
    %v353 = vpack.c.b16 %v327, %v326
    %v354 = vpack.c.b16 %v329, %v328
    %v355 = vpack.c.b16 %v331, %v330
    %v356 = vpack.c.b16 %v333, %v332
    %v357 = vpack.c.b16 %v335, %v334
    %v358 = vpack.c.b16 %v337, %v336
    %v359 = vpack.c.b16 %v339, %v338
    %v360 = vpack.c.b16 %v341, %v340
    %v361 = vpack.c.b16 %v343, %v342
    %v362 = vpack.c.b16 %v345, %v344
    %v363 = vpack.c.b16 %v347, %v346
    %380 = vmatprep.subr.bf16.mxu0 0
    %381 = vmatpush1.bf16.msra.mxu0 %v348
    %382 = vmatprep.subr.bf16.mxu0 0
    %383 = vmatpush1.bf16.msra.mxu0 %v349
    %384 = vmatprep.subr.bf16.mxu0 0
    %385 = vmatpush1.bf16.msra.mxu0 %v350
    %386 = vmatprep.subr.bf16.mxu0 0
    %387 = vmatpush1.bf16.msra.mxu0 %v351
    %388 = vmatprep.subr.bf16.mxu0 0
    %389 = vmatpush1.bf16.msra.mxu0 %v352
    %390 = vmatprep.subr.bf16.mxu0 0
    %391 = vmatpush1.bf16.msra.mxu0 %v353
    %392 = vmatprep.subr.bf16.mxu0 0
    %393 = vmatpush1.bf16.msra.mxu0 %v354
    %394 = vmatprep.subr.bf16.mxu0 0
    %395 = vmatpush1.bf16.msra.mxu0 %v355
    %396 = vmatprep.subr.bf16.mxu0 0
    %397 = vmatpush1.bf16.msra.mxu0 %v356
    %398 = vmatprep.subr.bf16.mxu0 0
    %399 = vmatpush1.bf16.msra.mxu0 %v357
    %400 = vmatprep.subr.bf16.mxu0 0
    %401 = vmatpush1.bf16.msra.mxu0 %v358
    %402 = vmatprep.subr.bf16.mxu0 0
    %403 = vmatpush1.bf16.msra.mxu0 %v359
    %404 = vmatprep.subr.bf16.mxu0 0
    %405 = vmatpush1.bf16.msra.mxu0 %v360
    %406 = vmatprep.subr.bf16.mxu0 0
    %407 = vmatpush1.bf16.msra.mxu0 %v361
    %408 = vmatprep.subr.bf16.mxu0 0
    %409 = vmatpush1.bf16.msra.mxu0 %v362
    %410 = vmatprep.subr.bf16.mxu0 0
    %411 = vmatpush1.bf16.msra.mxu0 %v363
    %412 = vmatprep.mubr.bf16.mxu0 %v221
    %413 = vmatmul.mubr.bf16.gmra.mrb[0].mxu0 %v220
    %v414 = vpop.f32.mrb[0].mxu0
    %v415 = vadd.f32 %v122, %v414
    %v416 = vpop.f32.mrb[0].mxu0
    %v417 = vpop.f32.mrb[0].mxu0
    %v418 = vadd.f32 %v122, %v417
    %v419 = vpop.f32.mrb[0].mxu0
    %420 = vmatprep.mubr.bf16.mxu0 %v223
    %421 = vmatmul.mubr.bf16.gmra.mrb[0].mxu0 %v222
    %v422 = vpop.f32.mrb[0].mxu0
    %v423 = vadd.f32 %v122, %v422
    %v424 = vpop.f32.mrb[0].mxu0
    %v425 = vpop.f32.mrb[0].mxu0
    %v426 = vadd.f32 %v122, %v425
    %v427 = vpop.f32.mrb[0].mxu0
    %428 = vmatprep.mubr.bf16.mxu0 %v225
    %429 = vmatmul.mubr.bf16.gmra.mrb[0].mxu0 %v224
    %v430 = vpop.f32.mrb[0].mxu0
    %v431 = vadd.f32 %v122, %v430
    %v432 = vpop.f32.mrb[0].mxu0
    %v433 = vpop.f32.mrb[0].mxu0
    %v434 = vadd.f32 %v122, %v433
    %v435 = vpop.f32.mrb[0].mxu0
    %436 = vmatprep.mubr.bf16.mxu0 %v227
    %437 = vmatmul.mubr.bf16.gmra.mrb[0].mxu0 %v226
    %v438 = vpop.f32.mrb[0].mxu0
    %v439 = vadd.f32 %v122, %v438
    %v440 = vpop.f32.mrb[0].mxu0
    %v441 = vpop.f32.mrb[0].mxu0
    %v442 = vadd.f32 %v122, %v441
    %v443 = vpop.f32.mrb[0].mxu0
    %444 = vmatprep.mubr.bf16.mxu0 %v229
    %445 = vmatmul.mubr.bf16.gmra.mrb[0].mxu0 %v228
    %v446 = vpop.f32.mrb[0].mxu0
    %v447 = vadd.f32 %v122, %v446
    %v448 = vpop.f32.mrb[0].mxu0
    %v449 = vpop.f32.mrb[0].mxu0
    %v450 = vadd.f32 %v122, %v449
    %v451 = vpop.f32.mrb[0].mxu0
    %452 = vmatprep.mubr.bf16.mxu0 %v231
    %453 = vmatmul.mubr.bf16.gmra.mrb[0].mxu0 %v230
    %v454 = vpop.f32.mrb[0].mxu0
    %v455 = vadd.f32 %v122, %v454
    %v456 = vpop.f32.mrb[0].mxu0
    %v457 = vpop.f32.mrb[0].mxu0
    %v458 = vadd.f32 %v122, %v457
    %v459 = vpop.f32.mrb[0].mxu0
    %460 = vmatprep.mubr.bf16.mxu0 %v233
    %461 = vmatmul.mubr.bf16.gmra.mrb[0].mxu0 %v232
    %v462 = vpop.f32.mrb[0].mxu0
    %v463 = vadd.f32 %v122, %v462
    %v464 = vpop.f32.mrb[0].mxu0
    %v465 = vpop.f32.mrb[0].mxu0
    %v466 = vadd.f32 %v122, %v465
    %v467 = vpop.f32.mrb[0].mxu0
    %468 = vmatprep.mubr.bf16.mxu0 %v235
    %469 = vmatmul.mubr.bf16.gmra.mrb[0].mxu0 %v234
    %v470 = vpop.f32.mrb[0].mxu0
    %v471 = vadd.f32 %v122, %v470
    %v472 = vpop.f32.mrb[0].mxu0
    %v473 = vpop.f32.mrb[0].mxu0
    %v474 = vadd.f32 %v122, %v473
    %v475 = vpop.f32.mrb[0].mxu0
    %476 = vmatprep.mubr.bf16.mxu0 %v237
    %477 = vmatmul.mubr.bf16.gmra.mrb[0].mxu0 %v236
    %v478 = vpop.f32.mrb[0].mxu0
    %v479 = vadd.f32 %v122, %v478
    %v480 = vpop.f32.mrb[0].mxu0
    %v481 = vpop.f32.mrb[0].mxu0
    %v482 = vadd.f32 %v122, %v481
    %v483 = vpop.f32.mrb[0].mxu0
    %484 = vmatprep.mubr.bf16.mxu0 %v239
    %485 = vmatmul.mubr.bf16.gmra.mrb[0].mxu0 %v238
    %v486 = vpop.f32.mrb[0].mxu0
    %v487 = vadd.f32 %v122, %v486
    %v488 = vpop.f32.mrb[0].mxu0
    %v489 = vpop.f32.mrb[0].mxu0
    %v490 = vadd.f32 %v122, %v489
    %v491 = vpop.f32.mrb[0].mxu0
    %492 = vmatprep.mubr.bf16.mxu0 %v241
    %493 = vmatmul.mubr.bf16.gmra.mrb[0].mxu0 %v240
    %v494 = vpop.f32.mrb[0].mxu0
    %v495 = vadd.f32 %v122, %v494
    %v496 = vpop.f32.mrb[0].mxu0
    %v497 = vpop.f32.mrb[0].mxu0
    %v498 = vadd.f32 %v122, %v497
    %v499 = vpop.f32.mrb[0].mxu0
    %500 = vmatprep.mubr.bf16.mxu0 %v243
    %501 = vmatmul.mubr.bf16.gmra.mrb[0].mxu0 %v242
    %v502 = vpop.f32.mrb[0].mxu0
    %v503 = vadd.f32 %v122, %v502
    %v504 = vpop.f32.mrb[0].mxu0
    %v505 = vpop.f32.mrb[0].mxu0
    %v506 = vadd.f32 %v122, %v505
    %v507 = vpop.f32.mrb[0].mxu0
    %508 = vmatprep.mubr.bf16.mxu0 %v245
    %509 = vmatmul.mubr.bf16.gmra.mrb[0].mxu0 %v244
    %v510 = vpop.f32.mrb[0].mxu0
    %v511 = vadd.f32 %v122, %v510
    %v512 = vpop.f32.mrb[0].mxu0
    %v513 = vpop.f32.mrb[0].mxu0
    %v514 = vadd.f32 %v122, %v513
    %v515 = vpop.f32.mrb[0].mxu0
    %516 = vmatprep.mubr.bf16.mxu0 %v247
    %517 = vmatmul.mubr.bf16.gmra.mrb[0].mxu0 %v246
    %v518 = vpop.f32.mrb[0].mxu0
    %v519 = vadd.f32 %v122, %v518
    %v520 = vpop.f32.mrb[0].mxu0
    %v521 = vpop.f32.mrb[0].mxu0
    %v522 = vadd.f32 %v122, %v521
    %v523 = vpop.f32.mrb[0].mxu0
    %524 = vmatprep.mubr.bf16.mxu0 %v249
    %525 = vmatmul.mubr.bf16.gmra.mrb[0].mxu0 %v248
    %v526 = vpop.f32.mrb[0].mxu0
    %v527 = vadd.f32 %v122, %v526
    %v528 = vpop.f32.mrb[0].mxu0
    %v529 = vpop.f32.mrb[0].mxu0
    %v530 = vadd.f32 %v122, %v529
    %v531 = vpop.f32.mrb[0].mxu0
    %532 = vmatprep.mubr.bf16.mxu0 %v251
    %533 = vmatmul.mubr.bf16.gmra.mrb[0].mxu0 %v250
    %v534 = vpop.f32.mrb[0].mxu0
    %v535 = vadd.f32 %v122, %v534
    %v536 = vpop.f32.mrb[0].mxu0
    %v537 = vpop.f32.mrb[0].mxu0
    %v538 = vadd.f32 %v122, %v537
    %v539 = vpop.f32.mrb[0].mxu0
    %540 = vdwg.mxu0
    %v541 = vmax.f32 %v415, 0.0
    %v542 = vmax.f32 %v418, 0.0
    %v543 = vmax.f32 %v423, 0.0
    %v544 = vmax.f32 %v426, 0.0
    %v545 = vmax.f32 %v431, 0.0
    %v546 = vmax.f32 %v434, 0.0
    %v547 = vmax.f32 %v439, 0.0
    %v548 = vmax.f32 %v442, 0.0
    %v549 = vmax.f32 %v447, 0.0
    %v550 = vmax.f32 %v450, 0.0
    %v551 = vmax.f32 %v455, 0.0
    %v552 = vmax.f32 %v458, 0.0
    %v553 = vmax.f32 %v463, 0.0
    %v554 = vmax.f32 %v466, 0.0
    %v555 = vmax.f32 %v471, 0.0
    %v556 = vmax.f32 %v474, 0.0
    %v557 = vmax.f32 %v479, 0.0
    %v558 = vmax.f32 %v482, 0.0
    %v559 = vmax.f32 %v487, 0.0
    %v560 = vmax.f32 %v490, 0.0
    %v561 = vmax.f32 %v495, 0.0
    %v562 = vmax.f32 %v498, 0.0
    %v563 = vmax.f32 %v503, 0.0
    %v564 = vmax.f32 %v506, 0.0
    %v565 = vmax.f32 %v511, 0.0
    %v566 = vmax.f32 %v514, 0.0
    %v567 = vmax.f32 %v519, 0.0
    %v568 = vmax.f32 %v522, 0.0
    %v569 = vmax.f32 %v527, 0.0
    %v570 = vmax.f32 %v530, 0.0
    %v571 = vmax.f32 %v535, 0.0
    %v572 = vmax.f32 %v538, 0.0
    %v573 = vld [vmem:[#allocation5] sm:$0xff]
    %v574 = vld [vmem:[#allocation5 + $0x8] sm:$0xff]
    %v575 = vld [vmem:[#allocation5 + $0x10] sm:$0xff]
    %v576 = vld [vmem:[#allocation5 + $0x18] sm:$0xff]
    %v577 = vld [vmem:[#allocation5 + $0x20] sm:$0xff]
    %v578 = vld [vmem:[#allocation5 + $0x28] sm:$0xff]
    %v579 = vld [vmem:[#allocation5 + $0x30] sm:$0xff]
    %v580 = vld [vmem:[#allocation5 + $0x38] sm:$0xff]
    %v581 = vld [vmem:[#allocation5 + $0x40] sm:$0xff]
    %v582 = vld [vmem:[#allocation5 + $0x48] sm:$0xff]
    %v583 = vld [vmem:[#allocation5 + $0x50] sm:$0xff]
    %v584 = vld [vmem:[#allocation5 + $0x58] sm:$0xff]
    %v585 = vld [vmem:[#allocation5 + $0x60] sm:$0xff]
    %v586 = vld [vmem:[#allocation5 + $0x68] sm:$0xff]
    %v587 = vld [vmem:[#allocation5 + $0x70] sm:$0xff]
    %v588 = vld [vmem:[#allocation5 + $0x78] sm:$0xff]
    %v589 = vld [vmem:[#allocation5 + $0x80] sm:$0xff]
    %v590 = vld [vmem:[#allocation5 + $0x88] sm:$0xff]
    %v591 = vld [vmem:[#allocation5 + $0x90] sm:$0xff]
    %v592 = vld [vmem:[#allocation5 + $0x98] sm:$0xff]
    %v593 = vld [vmem:[#allocation5 + $0xa0] sm:$0xff]
    %v594 = vld [vmem:[#allocation5 + $0xa8] sm:$0xff]
    %v595 = vld [vmem:[#allocation5 + $0xb0] sm:$0xff]
    %v596 = vld [vmem:[#allocation5 + $0xb8] sm:$0xff]
    %v597 = vld [vmem:[#allocation5 + $0xc0] sm:$0xff]
    %v598 = vld [vmem:[#allocation5 + $0xc8] sm:$0xff]
    %v599 = vld [vmem:[#allocation5 + $0xd0] sm:$0xff]
    %v600 = vld [vmem:[#allocation5 + $0xd8] sm:$0xff]
    %v601 = vld [vmem:[#allocation5 + $0xe0] sm:$0xff]
    %v602 = vld [vmem:[#allocation5 + $0xe8] sm:$0xff]
    %v603 = vld [vmem:[#allocation5 + $0xf0] sm:$0xff]
    %v604 = vld [vmem:[#allocation5 + $0xf8] sm:$0xff]
    %v605 = vpack.c.bf16 %v542, %v541
    %v606 = vpack.c.bf16 %v544, %v543
    %v607 = vpack.c.bf16 %v546, %v545
    %v608 = vpack.c.bf16 %v548, %v547
    %v609 = vpack.c.bf16 %v550, %v549
    %v610 = vpack.c.bf16 %v552, %v551
    %v611 = vpack.c.bf16 %v554, %v553
    %v612 = vpack.c.bf16 %v556, %v555
    %v613 = vpack.c.bf16 %v558, %v557
    %v614 = vpack.c.bf16 %v560, %v559
    %v615 = vpack.c.bf16 %v562, %v561
    %v616 = vpack.c.bf16 %v564, %v563
    %v617 = vpack.c.bf16 %v566, %v565
    %v618 = vpack.c.bf16 %v568, %v567
    %v619 = vpack.c.bf16 %v570, %v569
    %v620 = vpack.c.bf16 %v572, %v571
    %v653 = vunpack.c.l.b16 %v573
    %v654 = vunpack.c.h.b16 %v573
    %v655 = vunpack.c.l.b16 %v574
    %v656 = vunpack.c.h.b16 %v574
    %v657 = vunpack.c.l.b16 %v575
    %v658 = vunpack.c.h.b16 %v575
    %v659 = vunpack.c.l.b16 %v576
    %v660 = vunpack.c.h.b16 %v576
    %v661 = vunpack.c.l.b16 %v577
    %v662 = vunpack.c.h.b16 %v577
    %v663 = vunpack.c.l.b16 %v578
    %v664 = vunpack.c.h.b16 %v578
    %v665 = vunpack.c.l.b16 %v579
    %v666 = vunpack.c.h.b16 %v579
    %v667 = vunpack.c.l.b16 %v580
    %v668 = vunpack.c.h.b16 %v580
    %v669 = vunpack.c.l.b16 %v581
    %v670 = vunpack.c.h.b16 %v581
    %v671 = vunpack.c.l.b16 %v582
    %v672 = vunpack.c.h.b16 %v582
    %v673 = vunpack.c.l.b16 %v583
    %v674 = vunpack.c.h.b16 %v583
    %v675 = vunpack.c.l.b16 %v584
    %v676 = vunpack.c.h.b16 %v584
    %v677 = vunpack.c.l.b16 %v585
    %v678 = vunpack.c.h.b16 %v585
    %v679 = vunpack.c.l.b16 %v586
    %v680 = vunpack.c.h.b16 %v586
    %v681 = vunpack.c.l.b16 %v587
    %v682 = vunpack.c.h.b16 %v587
    %v683 = vunpack.c.l.b16 %v588
    %v684 = vunpack.c.h.b16 %v588
    %v685 = vunpack.c.l.b16 %v589
    %v686 = vunpack.c.h.b16 %v589
    %v687 = vunpack.c.l.b16 %v590
    %v688 = vunpack.c.h.b16 %v590
    %v689 = vunpack.c.l.b16 %v591
    %v690 = vunpack.c.h.b16 %v591
    %v691 = vunpack.c.l.b16 %v592
    %v692 = vunpack.c.h.b16 %v592
    %v693 = vunpack.c.l.b16 %v593
    %v694 = vunpack.c.h.b16 %v593
    %v695 = vunpack.c.l.b16 %v594
    %v696 = vunpack.c.h.b16 %v594
    %v697 = vunpack.c.l.b16 %v595
    %v698 = vunpack.c.h.b16 %v595
    %v699 = vunpack.c.l.b16 %v596
    %v700 = vunpack.c.h.b16 %v596
    %v701 = vunpack.c.l.b16 %v597
    %v702 = vunpack.c.h.b16 %v597
    %v703 = vunpack.c.l.b16 %v598
    %v704 = vunpack.c.h.b16 %v598
    %v705 = vunpack.c.l.b16 %v599
    %v706 = vunpack.c.h.b16 %v599
    %v707 = vunpack.c.l.b16 %v600
    %v708 = vunpack.c.h.b16 %v600
    %v709 = vunpack.c.l.b16 %v601
    %v710 = vunpack.c.h.b16 %v601
    %v711 = vunpack.c.l.b16 %v602
    %v712 = vunpack.c.h.b16 %v602
    %v713 = vunpack.c.l.b16 %v603
    %v714 = vunpack.c.h.b16 %v603
    %v715 = vunpack.c.l.b16 %v604
    %v716 = vunpack.c.h.b16 %v604
    %v717 = vpack.c.b16 %v655, %v653
    %v718 = vpack.c.b16 %v656, %v654
    %v719 = vpack.c.b16 %v659, %v657
    %v720 = vpack.c.b16 %v660, %v658
    %v721 = vpack.c.b16 %v663, %v661
    %v722 = vpack.c.b16 %v664, %v662
    %v723 = vpack.c.b16 %v667, %v665
    %v724 = vpack.c.b16 %v668, %v666
    %v725 = vpack.c.b16 %v671, %v669
    %v726 = vpack.c.b16 %v672, %v670
    %v727 = vpack.c.b16 %v675, %v673
    %v728 = vpack.c.b16 %v676, %v674
    %v729 = vpack.c.b16 %v679, %v677
    %v730 = vpack.c.b16 %v680, %v678
    %v731 = vpack.c.b16 %v683, %v681
    %v732 = vpack.c.b16 %v684, %v682
    %v733 = vpack.c.b16 %v687, %v685
    %v734 = vpack.c.b16 %v688, %v686
    %v735 = vpack.c.b16 %v691, %v689
    %v736 = vpack.c.b16 %v692, %v690
    %v737 = vpack.c.b16 %v695, %v693
    %v738 = vpack.c.b16 %v696, %v694
    %v739 = vpack.c.b16 %v699, %v697
    %v740 = vpack.c.b16 %v700, %v698
    %v741 = vpack.c.b16 %v703, %v701
    %v742 = vpack.c.b16 %v704, %v702
    %v743 = vpack.c.b16 %v707, %v705
    %v744 = vpack.c.b16 %v708, %v706
    %v745 = vpack.c.b16 %v711, %v709
    %v746 = vpack.c.b16 %v712, %v710
    %v747 = vpack.c.b16 %v715, %v713
    %v748 = vpack.c.b16 %v716, %v714
    %781 = vmatprep.subr.bf16.mxu0 0
    %782 = vmatpush1.bf16.msra.mxu0 %v605
    %783 = vmatprep.subr.bf16.mxu0 0
    %784 = vmatpush1.bf16.msra.mxu0 %v606
    %785 = vmatprep.subr.bf16.mxu0 0
    %786 = vmatpush1.bf16.msra.mxu0 %v607
    %787 = vmatprep.subr.bf16.mxu0 0
    %788 = vmatpush1.bf16.msra.mxu0 %v608
    %789 = vmatprep.subr.bf16.mxu0 0
    %790 = vmatpush1.bf16.msra.mxu0 %v609
    %791 = vmatprep.subr.bf16.mxu0 0
    %792 = vmatpush1.bf16.msra.mxu0 %v610
    %793 = vmatprep.subr.bf16.mxu0 0
    %794 = vmatpush1.bf16.msra.mxu0 %v611
    %795 = vmatprep.subr.bf16.mxu0 0
    %796 = vmatpush1.bf16.msra.mxu0 %v612
    %797 = vmatprep.subr.bf16.mxu0 0
    %798 = vmatpush1.bf16.msra.mxu0 %v613
    %799 = vmatprep.subr.bf16.mxu0 0
    %800 = vmatpush1.bf16.msra.mxu0 %v614
    %801 = vmatprep.subr.bf16.mxu0 0
    %802 = vmatpush1.bf16.msra.mxu0 %v615
    %803 = vmatprep.subr.bf16.mxu0 0
    %804 = vmatpush1.bf16.msra.mxu0 %v616
    %805 = vmatprep.subr.bf16.mxu0 0
    %806 = vmatpush1.bf16.msra.mxu0 %v617
    %807 = vmatprep.subr.bf16.mxu0 0
    %808 = vmatpush1.bf16.msra.mxu0 %v618
    %809 = vmatprep.subr.bf16.mxu0 0
    %810 = vmatpush1.bf16.msra.mxu0 %v619
    %811 = vmatprep.subr.bf16.mxu0 0
    %812 = vmatpush1.bf16.msra.mxu0 %v620
    %813 = vmatprep.mubr.bf16.mxu0 %v718
    %814 = vmatmul.mubr.bf16.gmra.mrb[0].mxu0 %v717
    %v815 = vpop.f32.mrb[0].mxu0
    %v816 = vadd.f32 0.0, %v815
    %v817 = vpop.f32.mrb[0].mxu0
    %v818 = vpop.f32.mrb[0].mxu0
    %v819 = vadd.f32 0.0, %v818
    %v820 = vpop.f32.mrb[0].mxu0
    %821 = vmatprep.mubr.bf16.mxu0 %v720
    %822 = vmatmul.mubr.bf16.gmra.mrb[0].mxu0 %v719
    %v823 = vpop.f32.mrb[0].mxu0
    %v824 = vadd.f32 0.0, %v823
    %v825 = vpop.f32.mrb[0].mxu0
    %v826 = vpop.f32.mrb[0].mxu0
    %v827 = vadd.f32 0.0, %v826
    %v828 = vpop.f32.mrb[0].mxu0
    %829 = vmatprep.mubr.bf16.mxu0 %v722
    %830 = vmatmul.mubr.bf16.gmra.mrb[0].mxu0 %v721
    %v831 = vpop.f32.mrb[0].mxu0
    %v832 = vadd.f32 0.0, %v831
    %v833 = vpop.f32.mrb[0].mxu0
    %v834 = vpop.f32.mrb[0].mxu0
    %v835 = vadd.f32 0.0, %v834
    %v836 = vpop.f32.mrb[0].mxu0
    %837 = vmatprep.mubr.bf16.mxu0 %v724
    %838 = vmatmul.mubr.bf16.gmra.mrb[0].mxu0 %v723
    %v839 = vpop.f32.mrb[0].mxu0
    %v840 = vadd.f32 0.0, %v839
    %v841 = vpop.f32.mrb[0].mxu0
    %v842 = vpop.f32.mrb[0].mxu0
    %v843 = vadd.f32 0.0, %v842
    %v844 = vpop.f32.mrb[0].mxu0
    %845 = vmatprep.mubr.bf16.mxu0 %v726
    %846 = vmatmul.mubr.bf16.gmra.mrb[0].mxu0 %v725
    %v847 = vpop.f32.mrb[0].mxu0
    %v848 = vadd.f32 0.0, %v847
    %v849 = vpop.f32.mrb[0].mxu0
    %v850 = vpop.f32.mrb[0].mxu0
    %v851 = vadd.f32 0.0, %v850
    %v852 = vpop.f32.mrb[0].mxu0
    %853 = vmatprep.mubr.bf16.mxu0 %v728
    %854 = vmatmul.mubr.bf16.gmra.mrb[0].mxu0 %v727
    %v855 = vpop.f32.mrb[0].mxu0
    %v856 = vadd.f32 0.0, %v855
    %v857 = vpop.f32.mrb[0].mxu0
    %v858 = vpop.f32.mrb[0].mxu0
    %v859 = vadd.f32 0.0, %v858
    %v860 = vpop.f32.mrb[0].mxu0
    %861 = vmatprep.mubr.bf16.mxu0 %v730
    %862 = vmatmul.mubr.bf16.gmra.mrb[0].mxu0 %v729
    %v863 = vpop.f32.mrb[0].mxu0
    %v864 = vadd.f32 0.0, %v863
    %v865 = vpop.f32.mrb[0].mxu0
    %v866 = vpop.f32.mrb[0].mxu0
    %v867 = vadd.f32 0.0, %v866
    %v868 = vpop.f32.mrb[0].mxu0
    %869 = vmatprep.mubr.bf16.mxu0 %v732
    %870 = vmatmul.mubr.bf16.gmra.mrb[0].mxu0 %v731
    %v871 = vpop.f32.mrb[0].mxu0
    %v872 = vadd.f32 0.0, %v871
    %v873 = vpop.f32.mrb[0].mxu0
    %v874 = vpop.f32.mrb[0].mxu0
    %v875 = vadd.f32 0.0, %v874
    %v876 = vpop.f32.mrb[0].mxu0
    %877 = vmatprep.mubr.bf16.mxu0 %v734
    %878 = vmatmul.mubr.bf16.gmra.mrb[0].mxu0 %v733
    %v879 = vpop.f32.mrb[0].mxu0
    %v880 = vadd.f32 0.0, %v879
    %v881 = vpop.f32.mrb[0].mxu0
    %v882 = vpop.f32.mrb[0].mxu0
    %v883 = vadd.f32 0.0, %v882
    %v884 = vpop.f32.mrb[0].mxu0
    %885 = vmatprep.mubr.bf16.mxu0 %v736
    %886 = vmatmul.mubr.bf16.gmra.mrb[0].mxu0 %v735
    %v887 = vpop.f32.mrb[0].mxu0
    %v888 = vadd.f32 0.0, %v887
    %v889 = vpop.f32.mrb[0].mxu0
    %v890 = vpop.f32.mrb[0].mxu0
    %v891 = vadd.f32 0.0, %v890
    %v892 = vpop.f32.mrb[0].mxu0
    %893 = vmatprep.mubr.bf16.mxu0 %v738
    %894 = vmatmul.mubr.bf16.gmra.mrb[0].mxu0 %v737
    %v895 = vpop.f32.mrb[0].mxu0
    %v896 = vadd.f32 0.0, %v895
    %v897 = vpop.f32.mrb[0].mxu0
    %v898 = vpop.f32.mrb[0].mxu0
    %v899 = vadd.f32 0.0, %v898
    %v900 = vpop.f32.mrb[0].mxu0
    %901 = vmatprep.mubr.bf16.mxu0 %v740
    %902 = vmatmul.mubr.bf16.gmra.mrb[0].mxu0 %v739
    %v903 = vpop.f32.mrb[0].mxu0
    %v904 = vadd.f32 0.0, %v903
    %v905 = vpop.f32.mrb[0].mxu0
    %v906 = vpop.f32.mrb[0].mxu0
    %v907 = vadd.f32 0.0, %v906
    %v908 = vpop.f32.mrb[0].mxu0
    %909 = vmatprep.mubr.bf16.mxu0 %v742
    %910 = vmatmul.mubr.bf16.gmra.mrb[0].mxu0 %v741
    %v911 = vpop.f32.mrb[0].mxu0
    %v912 = vadd.f32 0.0, %v911
    %v913 = vpop.f32.mrb[0].mxu0
    %v914 = vpop.f32.mrb[0].mxu0
    %v915 = vadd.f32 0.0, %v914
    %v916 = vpop.f32.mrb[0].mxu0
    %917 = vmatprep.mubr.bf16.mxu0 %v744
    %918 = vmatmul.mubr.bf16.gmra.mrb[0].mxu0 %v743
    %v919 = vpop.f32.mrb[0].mxu0
    %v920 = vadd.f32 0.0, %v919
    %v921 = vpop.f32.mrb[0].mxu0
    %v922 = vpop.f32.mrb[0].mxu0
    %v923 = vadd.f32 0.0, %v922
    %v924 = vpop.f32.mrb[0].mxu0
    %925 = vmatprep.mubr.bf16.mxu0 %v746
    %926 = vmatmul.mubr.bf16.gmra.mrb[0].mxu0 %v745
    %v927 = vpop.f32.mrb[0].mxu0
    %v928 = vadd.f32 0.0, %v927
    %v929 = vpop.f32.mrb[0].mxu0
    %v930 = vpop.f32.mrb[0].mxu0
    %v931 = vadd.f32 0.0, %v930
    %v932 = vpop.f32.mrb[0].mxu0
    %933 = vmatprep.mubr.bf16.mxu0 %v748
    %934 = vmatmul.mubr.bf16.gmra.mrb[0].mxu0 %v747
    %v935 = vpop.f32.mrb[0].mxu0
    %v936 = vadd.f32 0.0, %v935
    %v937 = vpop.f32.mrb[0].mxu0
    %v938 = vpop.f32.mrb[0].mxu0
    %v939 = vadd.f32 0.0, %v938
    %v940 = vpop.f32.mrb[0].mxu0
    %941 = vdwg.mxu0
    %v942 = vld [vmem:[%s4] sm:$0xff]
    %v943 = vld [vmem:[%s4 + $0x8] sm:$0xff]
    %v944 = vld [vmem:[%s4 + $0x10] sm:$0xff]
    %v945 = vld [vmem:[%s4 + $0x18] sm:$0xff]
    %v946 = vld [vmem:[%s4 + $0x20] sm:$0xff]
    %v947 = vld [vmem:[%s4 + $0x28] sm:$0xff]
    %v948 = vld [vmem:[%s4 + $0x30] sm:$0xff]
    %v949 = vld [vmem:[%s4 + $0x38] sm:$0xff]
    %v950 = vld [vmem:[%s5] sm:$0x1]
    %v952 = vlaneseq
    %v953 = vshrl.u32 %v952, 7
    %v954 = vsub.s32 0, %v953
    %v955 = vrot.slane %v950, %v954
    %vm957 = vcmask 523264
    %v959 = vsel %vm957, %v816, 0
    %v962 = vsel %vm957, %v819, 0
    %v965 = vsel %vm957, %v824, 0
    %v968 = vsel %vm957, %v827, 0
    %v971 = vsel %vm957, %v832, 0
    %v974 = vsel %vm957, %v835, 0
    %v977 = vsel %vm957, %v840, 0
    %v980 = vsel %vm957, %v843, 0
    %v983 = vsel %vm957, %v848, 0
    %v986 = vsel %vm957, %v851, 0
    %v989 = vsel %vm957, %v856, 0
    %v992 = vsel %vm957, %v859, 0
    %v995 = vsel %vm957, %v864, 0
    %v998 = vsel %vm957, %v867, 0
    %v1001 = vsel %vm957, %v872, 0
    %v1004 = vsel %vm957, %v875, 0
    %v1007 = vsel %vm957, %v880, 0
    %v1010 = vsel %vm957, %v883, 0
    %v1013 = vsel %vm957, %v888, 0
    %v1016 = vsel %vm957, %v891, 0
    %v1019 = vsel %vm957, %v896, 0
    %v1022 = vsel %vm957, %v899, 0
    %v1025 = vsel %vm957, %v904, 0
    %v1028 = vsel %vm957, %v907, 0
    %v1031 = vsel %vm957, %v912, 0
    %v1034 = vsel %vm957, %v915, 0
    %v1037 = vsel %vm957, %v920, 0
    %v1040 = vsel %vm957, %v923, 0
    %v1043 = vsel %vm957, %v928, 0
    %v1046 = vsel %vm957, %v931, 0
    %v1049 = vsel %vm957, %v936, 0
    %v1052 = vsel %vm957, %v939, 0
    %1054 = vmatprep.subr.mxu0 0.0
    %1055 = vmatpush1.msra.mxu0 %v942
    %1056 = vmatprep.subr.mxu0 0.0
    %1057 = vmatpush1.msra.mxu0 %v943
    %1058 = vmatprep.subr.mxu0 0.0
    %1059 = vmatpush1.msra.mxu0 %v944
    %1060 = vmatprep.subr.mxu0 0.0
    %1061 = vmatpush1.msra.mxu0 %v945
    %1062 = vmatprep.subr.mxu0 0.0
    %1063 = vmatpush1.msra.mxu0 %v946
    %1064 = vmatprep.subr.mxu0 0.0
    %1065 = vmatpush1.msra.mxu0 %v947
    %1066 = vmatprep.subr.mxu0 0.0
    %1067 = vmatpush1.msra.mxu0 %v948
    %1068 = vmatprep.subr.mxu0 0.0
    %1069 = vmatpush1.msra.mxu0 %v949
    %1070 = vmatprep.subr.mxu0 0.0
    %1071 = vmatpush1.msra.mxu0 0.0
    %1072 = vmatprep.subr.mxu0 0.0
    %1073 = vmatpush1.msra.mxu0 0.0
    %1074 = vmatprep.subr.mxu0 0.0
    %1075 = vmatpush1.msra.mxu0 0.0
    %1076 = vmatprep.subr.mxu0 0.0
    %1077 = vmatpush1.msra.mxu0 0.0
    %1078 = vmatprep.subr.mxu0 0.0
    %1079 = vmatpush1.msra.mxu0 0.0
    %1080 = vmatprep.subr.mxu0 0.0
    %1081 = vmatpush1.msra.mxu0 0.0
    %1082 = vmatprep.subr.mxu0 0.0
    %1083 = vmatpush1.msra.mxu0 0.0
    %1084 = vmatprep.subr.mxu0 0.0
    %1085 = vmatpush1.msra.mxu0 0.0
    %1086 = vmatprep.subr.mxu0 0.0
    %1087 = vmatpush1.msra.mxu0 0.0
    %1088 = vmatprep.subr.mxu0 0.0
    %1089 = vmatpush1.msra.mxu0 0.0
    %1090 = vmatprep.subr.mxu0 0.0
    %1091 = vmatpush1.msra.mxu0 0.0
    %1092 = vmatprep.subr.mxu0 0.0
    %1093 = vmatpush1.msra.mxu0 0.0
    %1094 = vmatprep.subr.mxu0 0.0
    %1095 = vmatpush1.msra.mxu0 0.0
    %1096 = vmatprep.subr.mxu0 0.0
    %1097 = vmatpush1.msra.mxu0 0.0
    %1098 = vmatprep.subr.mxu0 0.0
    %1099 = vmatpush1.msra.mxu0 0.0
    %1100 = vmatprep.subr.mxu0 0.0
    %1101 = vmatpush1.msra.mxu0 0.0
    %1102 = vmatprep.subr.mxu0 0.0
    %1103 = vmatpush1.msra.mxu0 0.0
    %1104 = vmatprep.subr.mxu0 0.0
    %1105 = vmatpush1.msra.mxu0 0.0
    %1106 = vmatprep.subr.mxu0 0.0
    %1107 = vmatpush1.msra.mxu0 0.0
    %1108 = vmatprep.subr.mxu0 0.0
    %1109 = vmatpush1.msra.mxu0 0.0
    %1110 = vmatprep.subr.mxu0 0.0
    %1111 = vmatpush1.msra.mxu0 0.0
    %1112 = vmatprep.subr.mxu0 0.0
    %1113 = vmatpush1.msra.mxu0 0.0
    %1114 = vmatprep.subr.mxu0 0.0
    %1115 = vmatpush1.msra.mxu0 0.0
    %1116 = vmatprep.subr.mxu0 0.0
    %1117 = vmatpush1.msra.mxu0 0.0
    %1118 = vmatprep.mubr.f32.mxu0 0.0
    %1119 = vmatmul.mubr.f32.gmra.mrb[0].mxu0 %v959
    %v1120 = vpop.f32.mrb[0].mxu0
    %v1121 = vadd.f32 %v955, %v1120
    %v1122 = vpop.f32.mrb[0].mxu0
    %1123 = vmatprep.mubr.f32.mxu0 0.0
    %1124 = vmatmul.mubr.f32.gmra.mrb[0].mxu0 %v962
    %v1125 = vpop.f32.mrb[0].mxu0
    %v1126 = vadd.f32 %v955, %v1125
    %v1127 = vpop.f32.mrb[0].mxu0
    %1128 = vmatprep.mubr.f32.mxu0 0.0
    %1129 = vmatmul.mubr.f32.gmra.mrb[0].mxu0 %v965
    %v1130 = vpop.f32.mrb[0].mxu0
    %v1131 = vadd.f32 %v955, %v1130
    %v1132 = vpop.f32.mrb[0].mxu0
    %1133 = vmatprep.mubr.f32.mxu0 0.0
    %1134 = vmatmul.mubr.f32.gmra.mrb[0].mxu0 %v968
    %v1135 = vpop.f32.mrb[0].mxu0
    %v1136 = vadd.f32 %v955, %v1135
    %v1137 = vpop.f32.mrb[0].mxu0
    %1138 = vmatprep.mubr.f32.mxu0 0.0
    %1139 = vmatmul.mubr.f32.gmra.mrb[0].mxu0 %v971
    %v1140 = vpop.f32.mrb[0].mxu0
    %v1141 = vadd.f32 %v955, %v1140
    %v1142 = vpop.f32.mrb[0].mxu0
    %1143 = vmatprep.mubr.f32.mxu0 0.0
    %1144 = vmatmul.mubr.f32.gmra.mrb[0].mxu0 %v974
    %v1145 = vpop.f32.mrb[0].mxu0
    %v1146 = vadd.f32 %v955, %v1145
    %v1147 = vpop.f32.mrb[0].mxu0
    %1148 = vmatprep.mubr.f32.mxu0 0.0
    %1149 = vmatmul.mubr.f32.gmra.mrb[0].mxu0 %v977
    %v1150 = vpop.f32.mrb[0].mxu0
    %v1151 = vadd.f32 %v955, %v1150
    %v1152 = vpop.f32.mrb[0].mxu0
    %1153 = vmatprep.mubr.f32.mxu0 0.0
    %1154 = vmatmul.mubr.f32.gmra.mrb[0].mxu0 %v980
    %v1155 = vpop.f32.mrb[0].mxu0
    %v1156 = vadd.f32 %v955, %v1155
    %v1157 = vpop.f32.mrb[0].mxu0
    %1158 = vmatprep.mubr.f32.mxu0 0.0
    %1159 = vmatmul.mubr.f32.gmra.mrb[0].mxu0 %v983
    %v1160 = vpop.f32.mrb[0].mxu0
    %v1161 = vadd.f32 %v955, %v1160
    %v1162 = vpop.f32.mrb[0].mxu0
    %1163 = vmatprep.mubr.f32.mxu0 0.0
    %1164 = vmatmul.mubr.f32.gmra.mrb[0].mxu0 %v986
    %v1165 = vpop.f32.mrb[0].mxu0
    %v1166 = vadd.f32 %v955, %v1165
    %v1167 = vpop.f32.mrb[0].mxu0
    %1168 = vmatprep.mubr.f32.mxu0 0.0
    %1169 = vmatmul.mubr.f32.gmra.mrb[0].mxu0 %v989
    %v1170 = vpop.f32.mrb[0].mxu0
    %v1171 = vadd.f32 %v955, %v1170
    %v1172 = vpop.f32.mrb[0].mxu0
    %1173 = vmatprep.mubr.f32.mxu0 0.0
    %1174 = vmatmul.mubr.f32.gmra.mrb[0].mxu0 %v992
    %v1175 = vpop.f32.mrb[0].mxu0
    %v1176 = vadd.f32 %v955, %v1175
    %v1177 = vpop.f32.mrb[0].mxu0
    %1178 = vmatprep.mubr.f32.mxu0 0.0
    %1179 = vmatmul.mubr.f32.gmra.mrb[0].mxu0 %v995
    %v1180 = vpop.f32.mrb[0].mxu0
    %v1181 = vadd.f32 %v955, %v1180
    %v1182 = vpop.f32.mrb[0].mxu0
    %1183 = vmatprep.mubr.f32.mxu0 0.0
    %1184 = vmatmul.mubr.f32.gmra.mrb[0].mxu0 %v998
    %v1185 = vpop.f32.mrb[0].mxu0
    %v1186 = vadd.f32 %v955, %v1185
    %v1187 = vpop.f32.mrb[0].mxu0
    %1188 = vmatprep.mubr.f32.mxu0 0.0
    %1189 = vmatmul.mubr.f32.gmra.mrb[0].mxu0 %v1001
    %v1190 = vpop.f32.mrb[0].mxu0
    %v1191 = vadd.f32 %v955, %v1190
    %v1192 = vpop.f32.mrb[0].mxu0
    %1193 = vmatprep.mubr.f32.mxu0 0.0
    %1194 = vmatmul.mubr.f32.gmra.mrb[0].mxu0 %v1004
    %v1195 = vpop.f32.mrb[0].mxu0
    %v1196 = vadd.f32 %v955, %v1195
    %v1197 = vpop.f32.mrb[0].mxu0
    %1198 = vmatprep.mubr.f32.mxu0 0.0
    %1199 = vmatmul.mubr.f32.gmra.mrb[0].mxu0 %v1007
    %v1200 = vpop.f32.mrb[0].mxu0
    %v1201 = vadd.f32 %v955, %v1200
    %v1202 = vpop.f32.mrb[0].mxu0
    %1203 = vmatprep.mubr.f32.mxu0 0.0
    %1204 = vmatmul.mubr.f32.gmra.mrb[0].mxu0 %v1010
    %v1205 = vpop.f32.mrb[0].mxu0
    %v1206 = vadd.f32 %v955, %v1205
    %v1207 = vpop.f32.mrb[0].mxu0
    %1208 = vmatprep.mubr.f32.mxu0 0.0
    %1209 = vmatmul.mubr.f32.gmra.mrb[0].mxu0 %v1013
    %v1210 = vpop.f32.mrb[0].mxu0
    %v1211 = vadd.f32 %v955, %v1210
    %v1212 = vpop.f32.mrb[0].mxu0
    %1213 = vmatprep.mubr.f32.mxu0 0.0
    %1214 = vmatmul.mubr.f32.gmra.mrb[0].mxu0 %v1016
    %v1215 = vpop.f32.mrb[0].mxu0
    %v1216 = vadd.f32 %v955, %v1215
    %v1217 = vpop.f32.mrb[0].mxu0
    %1218 = vmatprep.mubr.f32.mxu0 0.0
    %1219 = vmatmul.mubr.f32.gmra.mrb[0].mxu0 %v1019
    %v1220 = vpop.f32.mrb[0].mxu0
    %v1221 = vadd.f32 %v955, %v1220
    %v1222 = vpop.f32.mrb[0].mxu0
    %1223 = vmatprep.mubr.f32.mxu0 0.0
    %1224 = vmatmul.mubr.f32.gmra.mrb[0].mxu0 %v1022
    %v1225 = vpop.f32.mrb[0].mxu0
    %v1226 = vadd.f32 %v955, %v1225
    %v1227 = vpop.f32.mrb[0].mxu0
    %1228 = vmatprep.mubr.f32.mxu0 0.0
    %1229 = vmatmul.mubr.f32.gmra.mrb[0].mxu0 %v1025
    %v1230 = vpop.f32.mrb[0].mxu0
    %v1231 = vadd.f32 %v955, %v1230
    %v1232 = vpop.f32.mrb[0].mxu0
    %1233 = vmatprep.mubr.f32.mxu0 0.0
    %1234 = vmatmul.mubr.f32.gmra.mrb[0].mxu0 %v1028
    %v1235 = vpop.f32.mrb[0].mxu0
    %v1236 = vadd.f32 %v955, %v1235
    %v1237 = vpop.f32.mrb[0].mxu0
    %1238 = vmatprep.mubr.f32.mxu0 0.0
    %1239 = vmatmul.mubr.f32.gmra.mrb[0].mxu0 %v1031
    %v1240 = vpop.f32.mrb[0].mxu0
    %v1241 = vadd.f32 %v955, %v1240
    %v1242 = vpop.f32.mrb[0].mxu0
    %1243 = vmatprep.mubr.f32.mxu0 0.0
    %1244 = vmatmul.mubr.f32.gmra.mrb[0].mxu0 %v1034
    %v1245 = vpop.f32.mrb[0].mxu0
    %v1246 = vadd.f32 %v955, %v1245
    %v1247 = vpop.f32.mrb[0].mxu0
    %1248 = vmatprep.mubr.f32.mxu0 0.0
    %1249 = vmatmul.mubr.f32.gmra.mrb[0].mxu0 %v1037
    %v1250 = vpop.f32.mrb[0].mxu0
    %v1251 = vadd.f32 %v955, %v1250
    %v1252 = vpop.f32.mrb[0].mxu0
    %1253 = vmatprep.mubr.f32.mxu0 0.0
    %1254 = vmatmul.mubr.f32.gmra.mrb[0].mxu0 %v1040
    %v1255 = vpop.f32.mrb[0].mxu0
    %v1256 = vadd.f32 %v955, %v1255
    %v1257 = vpop.f32.mrb[0].mxu0
    %1258 = vmatprep.mubr.f32.mxu0 0.0
    %1259 = vmatmul.mubr.f32.gmra.mrb[0].mxu0 %v1043
    %v1260 = vpop.f32.mrb[0].mxu0
    %v1261 = vadd.f32 %v955, %v1260
    %v1262 = vpop.f32.mrb[0].mxu0
    %1263 = vmatprep.mubr.f32.mxu0 0.0
    %1264 = vmatmul.mubr.f32.gmra.mrb[0].mxu0 %v1046
    %v1265 = vpop.f32.mrb[0].mxu0
    %v1266 = vadd.f32 %v955, %v1265
    %v1267 = vpop.f32.mrb[0].mxu0
    %1268 = vmatprep.mubr.f32.mxu0 0.0
    %1269 = vmatmul.mubr.f32.gmra.mrb[0].mxu0 %v1049
    %v1270 = vpop.f32.mrb[0].mxu0
    %v1271 = vadd.f32 %v955, %v1270
    %v1272 = vpop.f32.mrb[0].mxu0
    %1273 = vmatprep.mubr.f32.mxu0 0.0
    %1274 = vmatmul.mubr.f32.gmra.mrb[0].mxu0 %v1052
    %v1275 = vpop.f32.mrb[0].mxu0
    %v1276 = vadd.f32 %v955, %v1275
    %v1277 = vpop.f32.mrb[0].mxu0
    %1278 = vdwg.mxu0
    %v1279 = vlaneseq
    %v1280 = vand.u32 %v1279, 127
    %vm1281 = vcmp.lt.s32.totalorder %v1280, 8
    %v1282 = vsel %vm1281, %v1121, -1e+30
    %v1283 = vsel %vm1281, %v1126, -1e+30
    %v1284 = vsel %vm1281, %v1131, -1e+30
    %v1285 = vsel %vm1281, %v1136, -1e+30
    %v1286 = vsel %vm1281, %v1141, -1e+30
    %v1287 = vsel %vm1281, %v1146, -1e+30
    %v1288 = vsel %vm1281, %v1151, -1e+30
    %v1289 = vsel %vm1281, %v1156, -1e+30
    %v1290 = vsel %vm1281, %v1161, -1e+30
    %v1291 = vsel %vm1281, %v1166, -1e+30
    %v1292 = vsel %vm1281, %v1171, -1e+30
    %v1293 = vsel %vm1281, %v1176, -1e+30
    %v1294 = vsel %vm1281, %v1181, -1e+30
    %v1295 = vsel %vm1281, %v1186, -1e+30
    %v1296 = vsel %vm1281, %v1191, -1e+30
    %v1297 = vsel %vm1281, %v1196, -1e+30
    %v1298 = vsel %vm1281, %v1201, -1e+30
    %v1299 = vsel %vm1281, %v1206, -1e+30
    %v1300 = vsel %vm1281, %v1211, -1e+30
    %v1301 = vsel %vm1281, %v1216, -1e+30
    %v1302 = vsel %vm1281, %v1221, -1e+30
    %v1303 = vsel %vm1281, %v1226, -1e+30
    %v1304 = vsel %vm1281, %v1231, -1e+30
    %v1305 = vsel %vm1281, %v1236, -1e+30
    %v1306 = vsel %vm1281, %v1241, -1e+30
    %v1307 = vsel %vm1281, %v1246, -1e+30
    %v1308 = vsel %vm1281, %v1251, -1e+30
    %v1309 = vsel %vm1281, %v1256, -1e+30
    %v1310 = vsel %vm1281, %v1261, -1e+30
    %v1311 = vsel %vm1281, %v1266, -1e+30
    %v1312 = vsel %vm1281, %v1271, -1e+30
    %v1313 = vsel %vm1281, %v1276, -1e+30
    %1314 = vmax.xlane.f32.xlu0 %v1282
    %v1315 = vpop.xlane.xlu0 %1314
    %1316 = vmax.xlane.f32.xlu0 %v1283
    %v1317 = vpop.xlane.xlu0 %1316
    %1318 = vmax.xlane.f32.xlu0 %v1284
    %v1319 = vpop.xlane.xlu0 %1318
    %1320 = vmax.xlane.f32.xlu0 %v1285
    %v1321 = vpop.xlane.xlu0 %1320
    %1322 = vmax.xlane.f32.xlu0 %v1286
    %v1323 = vpop.xlane.xlu0 %1322
    %1324 = vmax.xlane.f32.xlu0 %v1287
    %v1325 = vpop.xlane.xlu0 %1324
    %1326 = vmax.xlane.f32.xlu0 %v1288
    %v1327 = vpop.xlane.xlu0 %1326
    %1328 = vmax.xlane.f32.xlu0 %v1289
    %v1329 = vpop.xlane.xlu0 %1328
    %1330 = vmax.xlane.f32.xlu0 %v1290
    %v1331 = vpop.xlane.xlu0 %1330
    %1332 = vmax.xlane.f32.xlu0 %v1291
    %v1333 = vpop.xlane.xlu0 %1332
    %1334 = vmax.xlane.f32.xlu0 %v1292
    %v1335 = vpop.xlane.xlu0 %1334
    %1336 = vmax.xlane.f32.xlu0 %v1293
    %v1337 = vpop.xlane.xlu0 %1336
    %1338 = vmax.xlane.f32.xlu0 %v1294
    %v1339 = vpop.xlane.xlu0 %1338
    %1340 = vmax.xlane.f32.xlu0 %v1295
    %v1341 = vpop.xlane.xlu0 %1340
    %1342 = vmax.xlane.f32.xlu0 %v1296
    %v1343 = vpop.xlane.xlu0 %1342
    %1344 = vmax.xlane.f32.xlu0 %v1297
    %v1345 = vpop.xlane.xlu0 %1344
    %1346 = vmax.xlane.f32.xlu0 %v1298
    %v1347 = vpop.xlane.xlu0 %1346
    %1348 = vmax.xlane.f32.xlu0 %v1299
    %v1349 = vpop.xlane.xlu0 %1348
    %1350 = vmax.xlane.f32.xlu0 %v1300
    %v1351 = vpop.xlane.xlu0 %1350
    %1352 = vmax.xlane.f32.xlu0 %v1301
    %v1353 = vpop.xlane.xlu0 %1352
    %1354 = vmax.xlane.f32.xlu0 %v1302
    %v1355 = vpop.xlane.xlu0 %1354
    %1356 = vmax.xlane.f32.xlu0 %v1303
    %v1357 = vpop.xlane.xlu0 %1356
    %1358 = vmax.xlane.f32.xlu0 %v1304
    %v1359 = vpop.xlane.xlu0 %1358
    %1360 = vmax.xlane.f32.xlu0 %v1305
    %v1361 = vpop.xlane.xlu0 %1360
    %1362 = vmax.xlane.f32.xlu0 %v1306
    %v1363 = vpop.xlane.xlu0 %1362
    %1364 = vmax.xlane.f32.xlu0 %v1307
    %v1365 = vpop.xlane.xlu0 %1364
    %1366 = vmax.xlane.f32.xlu0 %v1308
    %v1367 = vpop.xlane.xlu0 %1366
    %1368 = vmax.xlane.f32.xlu0 %v1309
    %v1369 = vpop.xlane.xlu0 %1368
    %1370 = vmax.xlane.f32.xlu0 %v1310
    %v1371 = vpop.xlane.xlu0 %1370
    %1372 = vmax.xlane.f32.xlu0 %v1311
    %v1373 = vpop.xlane.xlu0 %1372
    %1374 = vmax.xlane.f32.xlu0 %v1312
    %v1375 = vpop.xlane.xlu0 %1374
    %1376 = vmax.xlane.f32.xlu0 %v1313
    %v1377 = vpop.xlane.xlu0 %1376
    %v1378 = vsub.f32 %v1282, %v1315
    %v1379 = vsub.f32 %v1283, %v1317
    %v1380 = vsub.f32 %v1284, %v1319
    %v1381 = vsub.f32 %v1285, %v1321
    %v1382 = vsub.f32 %v1286, %v1323
    %v1383 = vsub.f32 %v1287, %v1325
    %v1384 = vsub.f32 %v1288, %v1327
    %v1385 = vsub.f32 %v1289, %v1329
    %v1386 = vsub.f32 %v1290, %v1331
    %v1387 = vsub.f32 %v1291, %v1333
    %v1388 = vsub.f32 %v1292, %v1335
    %v1389 = vsub.f32 %v1293, %v1337
    %v1390 = vsub.f32 %v1294, %v1339
    %v1391 = vsub.f32 %v1295, %v1341
    %v1392 = vsub.f32 %v1296, %v1343
    %v1393 = vsub.f32 %v1297, %v1345
    %v1394 = vsub.f32 %v1298, %v1347
    %v1395 = vsub.f32 %v1299, %v1349
    %v1396 = vsub.f32 %v1300, %v1351
    %v1397 = vsub.f32 %v1301, %v1353
    %v1398 = vsub.f32 %v1302, %v1355
    %v1399 = vsub.f32 %v1303, %v1357
    %v1400 = vsub.f32 %v1304, %v1359
    %v1401 = vsub.f32 %v1305, %v1361
    %v1402 = vsub.f32 %v1306, %v1363
    %v1403 = vsub.f32 %v1307, %v1365
    %v1404 = vsub.f32 %v1308, %v1367
    %v1405 = vsub.f32 %v1309, %v1369
    %v1406 = vsub.f32 %v1310, %v1371
    %v1407 = vsub.f32 %v1311, %v1373
    %v1408 = vsub.f32 %v1312, %v1375
    %v1409 = vsub.f32 %v1313, %v1377
    %v1410 = vmul.f32 %v1378, 1.442695
    %v1411 = vpow.pop %v1410
    %v1412 = vmul.f32 %v1379, 1.442695
    %v1413 = vpow.pop %v1412
    %v1414 = vmul.f32 %v1380, 1.442695
    %v1415 = vpow.pop %v1414
    %v1416 = vmul.f32 %v1381, 1.442695
    %v1417 = vpow.pop %v1416
    %v1418 = vmul.f32 %v1382, 1.442695
    %v1419 = vpow.pop %v1418
    %v1420 = vmul.f32 %v1383, 1.442695
    %v1421 = vpow.pop %v1420
    %v1422 = vmul.f32 %v1384, 1.442695
    %v1423 = vpow.pop %v1422
    %v1424 = vmul.f32 %v1385, 1.442695
    %v1425 = vpow.pop %v1424
    %v1426 = vmul.f32 %v1386, 1.442695
    %v1427 = vpow.pop %v1426
    %v1428 = vmul.f32 %v1387, 1.442695
    %v1429 = vpow.pop %v1428
    %v1430 = vmul.f32 %v1388, 1.442695
    %v1431 = vpow.pop %v1430
    %v1432 = vmul.f32 %v1389, 1.442695
    %v1433 = vpow.pop %v1432
    %v1434 = vmul.f32 %v1390, 1.442695
    %v1435 = vpow.pop %v1434
    %v1436 = vmul.f32 %v1391, 1.442695
    %v1437 = vpow.pop %v1436
    %v1438 = vmul.f32 %v1392, 1.442695
    %v1439 = vpow.pop %v1438
    %v1440 = vmul.f32 %v1393, 1.442695
    %v1441 = vpow.pop %v1440
    %v1442 = vmul.f32 %v1394, 1.442695
    %v1443 = vpow.pop %v1442
    %v1444 = vmul.f32 %v1395, 1.442695
    %v1445 = vpow.pop %v1444
    %v1446 = vmul.f32 %v1396, 1.442695
    %v1447 = vpow.pop %v1446
    %v1448 = vmul.f32 %v1397, 1.442695
    %v1449 = vpow.pop %v1448
    %v1450 = vmul.f32 %v1398, 1.442695
    %v1451 = vpow.pop %v1450
    %v1452 = vmul.f32 %v1399, 1.442695
    %v1453 = vpow.pop %v1452
    %v1454 = vmul.f32 %v1400, 1.442695
    %v1455 = vpow.pop %v1454
    %v1456 = vmul.f32 %v1401, 1.442695
    %v1457 = vpow.pop %v1456
    %v1458 = vmul.f32 %v1402, 1.442695
    %v1459 = vpow.pop %v1458
    %v1460 = vmul.f32 %v1403, 1.442695
    %v1461 = vpow.pop %v1460
    %v1462 = vmul.f32 %v1404, 1.442695
    %v1463 = vpow.pop %v1462
    %v1464 = vmul.f32 %v1405, 1.442695
    %v1465 = vpow.pop %v1464
    %v1466 = vmul.f32 %v1406, 1.442695
    %v1467 = vpow.pop %v1466
    %v1468 = vmul.f32 %v1407, 1.442695
    %v1469 = vpow.pop %v1468
    %v1470 = vmul.f32 %v1408, 1.442695
    %v1471 = vpow.pop %v1470
    %v1472 = vmul.f32 %v1409, 1.442695
    %v1473 = vpow.pop %v1472
    %1474 = vadd.xlane.f32.xlu0 %v1411
    %v1475 = vpop.xlane.xlu0 %1474
    %1476 = vadd.xlane.f32.xlu0 %v1413
    %v1477 = vpop.xlane.xlu0 %1476
    %1478 = vadd.xlane.f32.xlu0 %v1415
    %v1479 = vpop.xlane.xlu0 %1478
    %1480 = vadd.xlane.f32.xlu0 %v1417
    %v1481 = vpop.xlane.xlu0 %1480
    %1482 = vadd.xlane.f32.xlu0 %v1419
    %v1483 = vpop.xlane.xlu0 %1482
    %1484 = vadd.xlane.f32.xlu0 %v1421
    %v1485 = vpop.xlane.xlu0 %1484
    %1486 = vadd.xlane.f32.xlu0 %v1423
    %v1487 = vpop.xlane.xlu0 %1486
    %1488 = vadd.xlane.f32.xlu0 %v1425
    %v1489 = vpop.xlane.xlu0 %1488
    %1490 = vadd.xlane.f32.xlu0 %v1427
    %v1491 = vpop.xlane.xlu0 %1490
    %1492 = vadd.xlane.f32.xlu0 %v1429
    %v1493 = vpop.xlane.xlu0 %1492
    %1494 = vadd.xlane.f32.xlu0 %v1431
    %v1495 = vpop.xlane.xlu0 %1494
    %1496 = vadd.xlane.f32.xlu0 %v1433
    %v1497 = vpop.xlane.xlu0 %1496
    %1498 = vadd.xlane.f32.xlu0 %v1435
    %v1499 = vpop.xlane.xlu0 %1498
    %1500 = vadd.xlane.f32.xlu0 %v1437
    %v1501 = vpop.xlane.xlu0 %1500
    %1502 = vadd.xlane.f32.xlu0 %v1439
    %v1503 = vpop.xlane.xlu0 %1502
    %1504 = vadd.xlane.f32.xlu0 %v1441
    %v1505 = vpop.xlane.xlu0 %1504
    %1506 = vadd.xlane.f32.xlu0 %v1443
    %v1507 = vpop.xlane.xlu0 %1506
    %1508 = vadd.xlane.f32.xlu0 %v1445
    %v1509 = vpop.xlane.xlu0 %1508
    %1510 = vadd.xlane.f32.xlu0 %v1447
    %v1511 = vpop.xlane.xlu0 %1510
    %1512 = vadd.xlane.f32.xlu0 %v1449
    %v1513 = vpop.xlane.xlu0 %1512
    %1514 = vadd.xlane.f32.xlu0 %v1451
    %v1515 = vpop.xlane.xlu0 %1514
    %1516 = vadd.xlane.f32.xlu0 %v1453
    %v1517 = vpop.xlane.xlu0 %1516
    %1518 = vadd.xlane.f32.xlu0 %v1455
    %v1519 = vpop.xlane.xlu0 %1518
    %1520 = vadd.xlane.f32.xlu0 %v1457
    %v1521 = vpop.xlane.xlu0 %1520
    %1522 = vadd.xlane.f32.xlu0 %v1459
    %v1523 = vpop.xlane.xlu0 %1522
    %1524 = vadd.xlane.f32.xlu0 %v1461
    %v1525 = vpop.xlane.xlu0 %1524
    %1526 = vadd.xlane.f32.xlu0 %v1463
    %v1527 = vpop.xlane.xlu0 %1526
    %1528 = vadd.xlane.f32.xlu0 %v1465
    %v1529 = vpop.xlane.xlu0 %1528
    %1530 = vadd.xlane.f32.xlu0 %v1467
    %v1531 = vpop.xlane.xlu0 %1530
    %1532 = vadd.xlane.f32.xlu0 %v1469
    %v1533 = vpop.xlane.xlu0 %1532
    %1534 = vadd.xlane.f32.xlu0 %v1471
    %v1535 = vpop.xlane.xlu0 %1534
    %1536 = vadd.xlane.f32.xlu0 %v1473
    %v1537 = vpop.xlane.xlu0 %1536
    %v1538 = vlog2.pop %v1475
    %v1539 = vmul.f32 %v1538, 0.6931472
    %v1540 = vlog2.pop %v1477
    %v1541 = vmul.f32 %v1540, 0.6931472
    %v1542 = vlog2.pop %v1479
    %v1543 = vmul.f32 %v1542, 0.6931472
    %v1544 = vlog2.pop %v1481
    %v1545 = vmul.f32 %v1544, 0.6931472
    %v1546 = vlog2.pop %v1483
    %v1547 = vmul.f32 %v1546, 0.6931472
    %v1548 = vlog2.pop %v1485
    %v1549 = vmul.f32 %v1548, 0.6931472
    %v1550 = vlog2.pop %v1487
    %v1551 = vmul.f32 %v1550, 0.6931472
    %v1552 = vlog2.pop %v1489
    %v1553 = vmul.f32 %v1552, 0.6931472
    %v1554 = vlog2.pop %v1491
    %v1555 = vmul.f32 %v1554, 0.6931472
    %v1556 = vlog2.pop %v1493
    %v1557 = vmul.f32 %v1556, 0.6931472
    %v1558 = vlog2.pop %v1495
    %v1559 = vmul.f32 %v1558, 0.6931472
    %v1560 = vlog2.pop %v1497
    %v1561 = vmul.f32 %v1560, 0.6931472
    %v1562 = vlog2.pop %v1499
    %v1563 = vmul.f32 %v1562, 0.6931472
    %v1564 = vlog2.pop %v1501
    %v1565 = vmul.f32 %v1564, 0.6931472
    %v1566 = vlog2.pop %v1503
    %v1567 = vmul.f32 %v1566, 0.6931472
    %v1568 = vlog2.pop %v1505
    %v1569 = vmul.f32 %v1568, 0.6931472
    %v1570 = vlog2.pop %v1507
    %v1571 = vmul.f32 %v1570, 0.6931472
    %v1572 = vlog2.pop %v1509
    %v1573 = vmul.f32 %v1572, 0.6931472
    %v1574 = vlog2.pop %v1511
    %v1575 = vmul.f32 %v1574, 0.6931472
    %v1576 = vlog2.pop %v1513
    %v1577 = vmul.f32 %v1576, 0.6931472
    %v1578 = vlog2.pop %v1515
    %v1579 = vmul.f32 %v1578, 0.6931472
    %v1580 = vlog2.pop %v1517
    %v1581 = vmul.f32 %v1580, 0.6931472
    %v1582 = vlog2.pop %v1519
    %v1583 = vmul.f32 %v1582, 0.6931472
    %v1584 = vlog2.pop %v1521
    %v1585 = vmul.f32 %v1584, 0.6931472
    %v1586 = vlog2.pop %v1523
    %v1587 = vmul.f32 %v1586, 0.6931472
    %v1588 = vlog2.pop %v1525
    %v1589 = vmul.f32 %v1588, 0.6931472
    %v1590 = vlog2.pop %v1527
    %v1591 = vmul.f32 %v1590, 0.6931472
    %v1592 = vlog2.pop %v1529
    %v1593 = vmul.f32 %v1592, 0.6931472
    %v1594 = vlog2.pop %v1531
    %v1595 = vmul.f32 %v1594, 0.6931472
    %v1596 = vlog2.pop %v1533
    %v1597 = vmul.f32 %v1596, 0.6931472
    %v1598 = vlog2.pop %v1535
    %v1599 = vmul.f32 %v1598, 0.6931472
    %v1600 = vlog2.pop %v1537
    %v1601 = vmul.f32 %v1600, 0.6931472
    %v1602 = vsub.f32 %v1378, %v1539
    %v1603 = vsub.f32 %v1379, %v1541
    %v1604 = vsub.f32 %v1380, %v1543
    %v1605 = vsub.f32 %v1381, %v1545
    %v1606 = vsub.f32 %v1382, %v1547
    %v1607 = vsub.f32 %v1383, %v1549
    %v1608 = vsub.f32 %v1384, %v1551
    %v1609 = vsub.f32 %v1385, %v1553
    %v1610 = vsub.f32 %v1386, %v1555
    %v1611 = vsub.f32 %v1387, %v1557
    %v1612 = vsub.f32 %v1388, %v1559
    %v1613 = vsub.f32 %v1389, %v1561
    %v1614 = vsub.f32 %v1390, %v1563
    %v1615 = vsub.f32 %v1391, %v1565
    %v1616 = vsub.f32 %v1392, %v1567
    %v1617 = vsub.f32 %v1393, %v1569
    %v1618 = vsub.f32 %v1394, %v1571
    %v1619 = vsub.f32 %v1395, %v1573
    %v1620 = vsub.f32 %v1396, %v1575
    %v1621 = vsub.f32 %v1397, %v1577
    %v1622 = vsub.f32 %v1398, %v1579
    %v1623 = vsub.f32 %v1399, %v1581
    %v1624 = vsub.f32 %v1400, %v1583
    %v1625 = vsub.f32 %v1401, %v1585
    %v1626 = vsub.f32 %v1402, %v1587
    %v1627 = vsub.f32 %v1403, %v1589
    %v1628 = vsub.f32 %v1404, %v1591
    %v1629 = vsub.f32 %v1405, %v1593
    %v1630 = vsub.f32 %v1406, %v1595
    %v1631 = vsub.f32 %v1407, %v1597
    %v1632 = vsub.f32 %v1408, %v1599
    %v1633 = vsub.f32 %v1409, %v1601
    %1634 = vst [vmem:[#allocation7] sm:$0xff] %v1602
    %1635 = vst [vmem:[#allocation7 + $0x8] sm:$0xff] %v1603
    %1636 = vst [vmem:[#allocation7 + $0x10] sm:$0xff] %v1604
    %1637 = vst [vmem:[#allocation7 + $0x18] sm:$0xff] %v1605
    %1638 = vst [vmem:[#allocation7 + $0x20] sm:$0xff] %v1606
    %1639 = vst [vmem:[#allocation7 + $0x28] sm:$0xff] %v1607
    %1640 = vst [vmem:[#allocation7 + $0x30] sm:$0xff] %v1608
    %1641 = vst [vmem:[#allocation7 + $0x38] sm:$0xff] %v1609
    %1642 = vst [vmem:[#allocation7 + $0x40] sm:$0xff] %v1610
    %1643 = vst [vmem:[#allocation7 + $0x48] sm:$0xff] %v1611
    %1644 = vst [vmem:[#allocation7 + $0x50] sm:$0xff] %v1612
    %1645 = vst [vmem:[#allocation7 + $0x58] sm:$0xff] %v1613
    %1646 = vst [vmem:[#allocation7 + $0x60] sm:$0xff] %v1614
    %1647 = vst [vmem:[#allocation7 + $0x68] sm:$0xff] %v1615
    %1648 = vst [vmem:[#allocation7 + $0x70] sm:$0xff] %v1616
    %1649 = vst [vmem:[#allocation7 + $0x78] sm:$0xff] %v1617
    %1650 = vst [vmem:[#allocation7 + $0x80] sm:$0xff] %v1618
    %1651 = vst [vmem:[#allocation7 + $0x88] sm:$0xff] %v1619
    %1652 = vst [vmem:[#allocation7 + $0x90] sm:$0xff] %v1620
    %1653 = vst [vmem:[#allocation7 + $0x98] sm:$0xff] %v1621
    %1654 = vst [vmem:[#allocation7 + $0xa0] sm:$0xff] %v1622
    %1655 = vst [vmem:[#allocation7 + $0xa8] sm:$0xff] %v1623
    %1656 = vst [vmem:[#allocation7 + $0xb0] sm:$0xff] %v1624
    %1657 = vst [vmem:[#allocation7 + $0xb8] sm:$0xff] %v1625
    %1658 = vst [vmem:[#allocation7 + $0xc0] sm:$0xff] %v1626
    %1659 = vst [vmem:[#allocation7 + $0xc8] sm:$0xff] %v1627
    %1660 = vst [vmem:[#allocation7 + $0xd0] sm:$0xff] %v1628
    %1661 = vst [vmem:[#allocation7 + $0xd8] sm:$0xff] %v1629
    %1662 = vst [vmem:[#allocation7 + $0xe0] sm:$0xff] %v1630
    %1663 = vst [vmem:[#allocation7 + $0xe8] sm:$0xff] %v1631
    %1664 = vst [vmem:[#allocation7 + $0xf0] sm:$0xff] %v1632
    %1665 = vst [vmem:[#allocation7 + $0xf8] sm:$0xff] %v1633
    // Predicated region
    $region34: #{tpu_custom_call.1} parent=1 // pred_check
      _
    $region35: #{tpu_custom_call.1} parent=1 // pred_check_branch
      %1667 = sbr.rel (0) target = $region37
    $region36: #{tpu_custom_call.1} parent=1 // pred_region
      %s1669 = ssub.s32 4096, 4096
      %1670 = vsyncadd [#allocation4], %s1669
      %s1671 = sshll.u32 [#allocation7], 4
      %s1672 = int_to_ptr.vmem [resolvable:$true] %s1671
      %1677 = dma.vmem_to_hbm [thread:$0]  %s1672, 4096, %s6, [#allocation4], 128, 128, 8
    $region37: #{tpu_custom_call.1} parent=1 // pred_fallthru
      _
    // Predicated region
    $region38: #{tpu_custom_call.1} parent=1 // pred_check
      _
    $region39: #{tpu_custom_call.1} parent=1 // pred_check_branch
      %1679 = sbr.rel (0) target = $region41
    $region40: #{tpu_custom_call.1} parent=1 // pred_region
      %1680 = dma.done [#allocation4], 4096
    $region41: #{tpu_custom_call.1} parent=1 // pred_fallthru
      _
    %1681 = vsyncpa [#allocation3], 1
    %1682 = vsyncpa [#allocation6], 1
    %1683 = vsyncpa [#allocation4], 1

</llo_original>
